<compile_context>
chip_gen: v6e
topology: v6e:2x2x1
jax: 0.10.0
libtpu: 0.0.40
codegen_flags: <defaults>
</compile_context>

<pallas_src>
import jax
import jax.numpy as jnp
from jax import lax
from jax.experimental import pallas as pl
from jax.experimental.pallas import tpu as pltpu


def _round_up(x, m):
    return (x + m - 1) // m * m


# --------------------------------------------------------------------------
# Kernel bodies
# --------------------------------------------------------------------------
def _linear_kernel_full_k(x_ref, w_ref, b_ref, o_ref):
    """tk == D: single-shot matmul, no reduction grid axis, no accumulator."""
    o_ref[...] = (
        jnp.dot(x_ref[...], w_ref[...], preferred_element_type=jnp.float32)
        + b_ref[...]
    ).astype(o_ref.dtype)


def _linear_kernel_k_tiled(x_ref, w_ref, b_ref, o_ref, acc_ref):
    """K-tiled path: f32 VMEM accumulator over the last grid axis."""
    k = pl.program_id(2)
    partial = jnp.dot(x_ref[...], w_ref[...], preferred_element_type=jnp.float32)

    @pl.when(k == 0)
    def _():
        acc_ref[...] = partial            # direct store: no zero-init pass

    @pl.when(k > 0)
    def _():
        acc_ref[...] += partial

    @pl.when(k == pl.num_programs(2) - 1)
    def _():
        o_ref[...] = (acc_ref[...] + b_ref[...]).astype(o_ref.dtype)


# --------------------------------------------------------------------------
# Parameter prep (run ONCE, e.g. at model init) and tile planning
# --------------------------------------------------------------------------
def prepare_token_predictor_params(weight, bias, *, compute_dtype=jnp.bfloat16):
    """One-time prep: cast to bf16, transpose to (D, V), pad to 128 multiples."""
    V, D = weight.shape
    assert bias.shape == (V,)
    Dp, Vp = _round_up(D, 128), _round_up(V, 128)

    wt = jnp.transpose(weight.astype(compute_dtype))          # (D, V)
    if (Dp, Vp) != (D, V):
        wt = jnp.pad(wt, ((0, Dp - D), (0, Vp - V)))
    b2 = bias.astype(jnp.float32).reshape(1, V)
    if Vp != V:
        b2 = jnp.pad(b2, ((0, 0), (0, Vp - V)))
    return {"wt": wt, "b": b2, "V": V, "D": D}


def _vmem_capacity_bytes():
    try:
        info = pltpu.get_tpu_info()
        cap = getattr(info, "vmem_capacity_bytes", None)
        if cap:
            return int(cap)
    except Exception:
        pass
    return 64 * 1024 * 1024  # conservative (v7x per-TensorCore)


def _footprint_bytes(tm, tk, tn, use_k_axis, out_itemsize, in_itemsize=2):
    x_b = tm * tk * in_itemsize * 2          # double-buffered
    w_b = tk * tn * in_itemsize * 2
    b_b = tn * 4 * 2
    o_b = tm * tn * out_itemsize * 2
    acc = tm * tn * 4 if use_k_axis else 0
    return x_b + w_b + b_b + o_b + acc


def _aligned_divisors(n, cap):
    """Multiples of 128 that divide n, <= cap, descending (128 always present)."""
    cap = max(128, (cap // 128) * 128)
    start = min(n, cap)
    return [d for d in range(start, 127, -128) if n % d == 0]


def _pick_tm(B, tm_cap):
    b8 = _round_up(B, 8)
    if b8 <= tm_cap:
        return b8
    # Minimise padded batch; tie-break on larger tm (fewer weight re-streams).
    best_tm, best_bp = 8, _round_up(B, 8)
    for tm in range(8, tm_cap + 1, 8):
        bp = _round_up(B, tm)
        if bp < best_bp or (bp == best_bp and tm > best_tm):
            best_tm, best_bp = tm, bp
    return best_tm


def _pick_tiles(B, Dp, Vp, out_itemsize, budget, *, tn_cap, tk_cap,
                full_k_dim_limit):
    # Raise the batch-tile cap for training-sized batches so the weight is not
    # re-streamed too many times; decode-sized batches are unaffected.
    tm_cap = 512 if B > 256 else 256
    tm = _pick_tm(B, tm_cap)
    Bp = _round_up(B, tm)
    n_batch_tiles = Bp // tm

    tn_cands = _aligned_divisors(Vp, tn_cap)
    if n_batch_tiles == 1:
        # Keep >= 2 vocab tiles so both v7x TensorCores get work.
        pref = [t for t in tn_cands if Vp // t >= 2]
        if pref:
            tn_cands = pref

    # Full-K path: no reduction grid axis, no accumulator RMW.
    if Dp <= max(int(full_k_dim_limit), 0):
        for tn in tn_cands:
            if _footprint_bytes(tm, Dp, tn, False, out_itemsize) <= budget:
                return tm, Bp, Dp, tn, False

    # K-tiled fallback: pick the largest weight tile that fits, prefer large tk.
    tk_cands = _aligned_divisors(Dp, tk_cap)
    best = None
    for tn in tn_cands:
        for tk in tk_cands:
            if _footprint_bytes(tm, tk, tn, True, out_itemsize) <= budget:
                score = (tk * tn, tk)
                if best is None or score > best[0]:
                    best = (score, tk, tn)
    if best is not None:
        return tm, Bp, best[1], best[2], True
    return tm, Bp, tk_cands[-1], tn_cands[-1], True


# --------------------------------------------------------------------------
# Forward
# --------------------------------------------------------------------------
def token_predictor_forward(x, params, *, out_dtype=None,
                            tn_cap=2048, tk_cap=1024, full_k_dim_limit=4096):
    """TokenPredictor forward: x @ weight.T + bias, with prepared params.

    Args:
      x:      (B, D) f32 activations.
      params: dict from prepare_token_predictor_params().
      out_dtype: logits dtype (default: x.dtype; pass jnp.bfloat16 to halve the
                 output HBM stream when the consumer accepts it).
    Returns:
      (B, V) logits in out_dtype.
    """
    B, D = x.shape
    assert D == params["D"], (D, params["D"])
    wt, b2, V = params["wt"], params["b"], params["V"]
    Dp, Vp = wt.shape
    compute_dtype = wt.dtype
    out_dtype = x.dtype if out_dtype is None else out_dtype
    out_itemsize = jnp.dtype(out_dtype).itemsize

    vmem_cap = _vmem_capacity_bytes()
    budget = int(vmem_cap * 0.65)
    tm, Bp, tk, tn, use_k = _pick_tiles(
        B, Dp, Vp, out_itemsize, budget,
        tn_cap=tn_cap, tk_cap=tk_cap, full_k_dim_limit=full_k_dim_limit)

    # Per-call activation prep (tiny compared to the weight stream).
    xc = x.astype(compute_dtype)
    if (Bp, Dp) != (B, D):
        xc = jnp.pad(xc, ((0, Bp - B), (0, Dp - D)))

    cost = pl.CostEstimate(
        flops=2 * Bp * Dp * Vp,
        transcendentals=0,
        bytes_accessed=int(Bp * Dp * 2 + (Bp // tm) * Vp * Dp * 2
                           + Vp * 4 + Bp * Vp * out_itemsize),
    )
    footprint = _footprint_bytes(tm, tk, tn, use_k, out_itemsize)
    vmem_limit = int(min(vmem_cap * 9 // 10,
                         max(32 * 1024 * 1024, footprint + 16 * 1024 * 1024)))

    if not use_k:
        grid = (Bp // tm, Vp // tn)
        out = pl.pallas_call(
            _linear_kernel_full_k,
            out_shape=jax.ShapeDtypeStruct((Bp, Vp), out_dtype),
            grid_spec=pltpu.PrefetchScalarGridSpec(
                num_scalar_prefetch=0,
                grid=grid,
                in_specs=[
                    pl.BlockSpec((tm, Dp), lambda i, j: (i, 0)),   # x
                    pl.BlockSpec((Dp, tn), lambda i, j: (0, j)),   # weight (D, V)
                    pl.BlockSpec((1, tn), lambda i, j: (0, j)),    # bias
                ],
                out_specs=pl.BlockSpec((tm, tn), lambda i, j: (i, j)),
            ),
            compiler_params=pltpu.CompilerParams(
                dimension_semantics=("parallel", "parallel"),
                vmem_limit_bytes=vmem_limit,
            ),
            cost_estimate=cost,
        )(xc, wt, b2)
    else:
        grid = (Bp // tm, Vp // tn, Dp // tk)
        out = pl.pallas_call(
            _linear_kernel_k_tiled,
            out_shape=jax.ShapeDtypeStruct((Bp, Vp), out_dtype),
            grid_spec=pltpu.PrefetchScalarGridSpec(
                num_scalar_prefetch=0,
                grid=grid,
                in_specs=[
                    pl.BlockSpec((tm, tk), lambda i, j, k: (i, k)),   # x
                    pl.BlockSpec((tk, tn), lambda i, j, k: (k, j)),   # weight (D, V)
                    pl.BlockSpec((1, tn), lambda i, j, k: (0, j)),    # bias
                ],
                out_specs=pl.BlockSpec((tm, tn), lambda i, j, k: (i, j)),
                scratch_shapes=[pltpu.VMEM((tm, tn), jnp.float32)],
            ),
            compiler_params=pltpu.CompilerParams(
                dimension_semantics=("parallel", "parallel", "arbitrary"),
                vmem_limit_bytes=vmem_limit,
            ),
            cost_estimate=cost,
        )(xc, wt, b2)

    if (Bp, Vp) != (B, V):
        out = out[:B, :V]
    return out


# --------------------------------------------------------------------------
# Self-test
# --------------------------------------------------------------------------
if __name__ == "__main__":
    # Small but non-trivial: multiple vocab tiles and (for path 2) multiple
    # reduction steps.
    batch, input_dim, vocab_size = 16, 512, 2048

    key = jax.random.PRNGKey(0)
    kx, kw, kb = jax.random.split(key, 3)

    x = jax.random.normal(kx, (batch, input_dim), dtype=jnp.float32)
    # Mimic nn.Linear's uniform(-1/sqrt(D), 1/sqrt(D)) init.
    bound = 1.0 / (input_dim ** 0.5)
    weight = jax.random.uniform(kw, (vocab_size, input_dim),
                                minval=-bound, maxval=bound, dtype=jnp.float32)
    bias = jax.random.uniform(kb, (vocab_size,),
                              minval=-bound, maxval=bound, dtype=jnp.float32)

    # One-time parameter prep (cast / transpose / pad hoisted out of forward).
    params = prepare_token_predictor_params(weight, bias)

    # Path 1: full-K (no reduction grid axis), >= 2 vocab tiles.
    out = jax.block_until_ready(token_predictor_forward(x, params))
    assert out.shape == (batch, vocab_size)

    # Path 2: force the k-tiled accumulator path to exercise it as well.
    out2 = jax.block_until_ready(
        token_predictor_forward(x, params, tk_cap=256, tn_cap=512,
                                full_k_dim_limit=0))
    assert out2.shape == (batch, vocab_size)

    # Reference with the same bf16 input rounding, true-f32 matmul.
    xb = x.astype(jnp.bfloat16).astype(jnp.float32)
    wb = weight.astype(jnp.bfloat16).astype(jnp.float32)
    ref = jnp.matmul(xb, wb.T, precision=lax.Precision.HIGHEST) + bias
    assert jnp.allclose(out, ref, atol=2e-3, rtol=2e-3), \
        float(jnp.max(jnp.abs(out - ref)))
    assert jnp.allclose(out2, ref, atol=2e-3, rtol=2e-3), \
        float(jnp.max(jnp.abs(out2 - ref)))

    # Loose sanity against full-f32 math (bf16 streaming tradeoff).
    ref_f32 = jnp.matmul(x, weight.T, precision=lax.Precision.HIGHEST) + bias
    assert jnp.allclose(out, ref_f32, atol=5e-2, rtol=5e-2)

    print("KERNEL_OK")
</pallas_src>

<mosaic_0001>
module attributes {stable_mosaic.version = 11 : i64} {
  func.func @_linear_kernel_full_k(%arg0: i32, %arg1: i32, %arg2: memref<16x512xbf16, #tpu.memory_space<vmem>>, %arg3: memref<512x1024xbf16, #tpu.memory_space<vmem>>, %arg4: memref<1x1024xf32, #tpu.memory_space<vmem>>, %arg5: memref<16x1024xf32, #tpu.memory_space<vmem>>) attributes {dimension_semantics = [#tpu.dimension_semantics<parallel>, #tpu.dimension_semantics<parallel>], iteration_bounds = array<i64: 1, 2>, scalar_prefetch = 0 : i64, scratch_operands = 0 : i64, tpu.core_type = #tpu.core_type<tc>, window_params = [{transform_indices = @transform_0, window_bounds = array<i64: 16, 512>}, {transform_indices = @transform_1, window_bounds = array<i64: 512, 1024>}, {transform_indices = @transform_2, window_bounds = array<i64: 1, 1024>}, {transform_indices = @transform_3, window_bounds = array<i64: 16, 1024>}]} {
    %c0 = arith.constant 0 : index
    %c0_0 = arith.constant 0 : index
    %0 = vector.load %arg2[%c0, %c0_0] : memref<16x512xbf16, #tpu.memory_space<vmem>>, vector<16x512xbf16>
    %c0_1 = arith.constant 0 : index
    %c0_2 = arith.constant 0 : index
    %1 = vector.load %arg3[%c0_1, %c0_2] : memref<512x1024xbf16, #tpu.memory_space<vmem>>, vector<512x1024xbf16>
    %cst = arith.constant dense<0.000000e+00> : vector<16x1024xf32>
    %2 = tpu.matmul %0, %1, %cst {dimension_numbers = #tpu.dot_dimension_numbers<[1], [0], [0], [1], [0, 0, 1, 1], [], []>} : vector<16x512xbf16>, vector<512x1024xbf16>, vector<16x1024xf32> -> vector<16x1024xf32>
    %c0_3 = arith.constant 0 : index
    %c0_4 = arith.constant 0 : index
    %3 = vector.load %arg4[%c0_3, %c0_4] : memref<1x1024xf32, #tpu.memory_space<vmem>>, vector<1x1024xf32>
    %4 = vector.broadcast %3 : vector<1x1024xf32> to vector<16x1024xf32>
    %5 = arith.addf %2, %4 : vector<16x1024xf32>
    %c0_5 = arith.constant 0 : index
    %c0_6 = arith.constant 0 : index
    %6 = vector.load %arg5[%c0_5, %c0_6] : memref<16x1024xf32, #tpu.memory_space<vmem>>, vector<16x1024xf32>
    tpu.vector_store %arg5[%c0_5, %c0_6], %5 {strides = array<i32>} : memref<16x1024xf32, #tpu.memory_space<vmem>>, vector<16x1024xf32>,
    return
  }
  func.func @transform_0(%arg0: i32, %arg1: i32) -> (i32, i32) {
    %c0_i32 = arith.constant 0 : i32
    %c0_i32_0 = arith.constant 0 : i32
    return %arg0, %c0_i32 : i32, i32
  }
  func.func @transform_1(%arg0: i32, %arg1: i32) -> (i32, i32) {
    %c0_i32 = arith.constant 0 : i32
    %c0_i32_0 = arith.constant 0 : i32
    return %c0_i32, %arg1 : i32, i32
  }
  func.func @transform_2(%arg0: i32, %arg1: i32) -> (i32, i32) {
    %c0_i32 = arith.constant 0 : i32
    %c0_i32_0 = arith.constant 0 : i32
    return %c0_i32, %arg1 : i32, i32
  }
  func.func @transform_3(%arg0: i32, %arg1: i32) -> (i32, i32) {
    %c0_i32 = arith.constant 0 : i32
    return %arg0, %arg1 : i32, i32
  }
}

</mosaic_0001>

<llo_original>
// kernel: tpu_custom_call.1
$region0: #{tpu_custom_call.1}
  #allocation0 [shape = 'u32[]', space=smem, size = 0x4, offset = 0x4, fixed_abs, tag = 'smem constant byte address 0x4 - core index']
  #allocation1 [shape = 'u32[144,128]{1,0:T(1,128)}', space=vmem, size = 0x12000, scoped, tag = 'internal scratch']
  %s0 = inlined_call_operand.hbm [shape: bf16[16,512], index: 0, kind: input, shape index: {}]
  %s1 = inlined_call_operand.hbm [shape: bf16[512,2048], index: 1, kind: input, shape index: {}]
  %s2 = inlined_call_operand.hbm [shape: f32[1,2048], index: 2, kind: input, shape index: {}]
  %s3 = inlined_call_operand.hbm [shape: f32[16,2048], index: 3, kind: output, shape index: {}]
  %s4 = sld [smem:[#allocation0]]
  $region57: #{tpu_custom_call.1} parent=0
    _
  %s6 = ssub.s32 1, %s4
  %s7 = scalar_select 0, %s6, %s4
  $region1: #{tpu_custom_call.1} parent=0
    #allocation2 [shape = 'u8[16384]{0}', space=vmem, size = 0x4000, scoped, tag = 'input window, operand 0, single buffered']
    #allocation3 [shape = 's32[2]{0}', space=sflag, size = 0x8, scoped, tag = 'scoped memory for tpu_custom_call.1']
    #allocation4 [shape = 's32[2]{0}', space=sflag, size = 0x8, scoped, tag = 'scoped memory for tpu_custom_call.1']
    #allocation5 [shape = 'u8[2097152]{0}', space=vmem, size = 0x200000, scoped, tag = 'input window, operand 1']
    #allocation6 [shape = 's32[2]{0}', space=sflag, size = 0x8, scoped, tag = 'scoped memory for tpu_custom_call.1']
    #allocation7 [shape = 'u8[8192]{0}', space=vmem, size = 0x2000, scoped, tag = 'input window, operand 2']
    #allocation8 [shape = 'u8[131072]{0}', space=vmem, size = 0x20000, scoped, tag = 'output window, operand 0']
    %8 = vsyncpa [#allocation3], 0
    %9 = vsyncpa [#allocation6], 0
    %s10 = scalar_lea.sflag [#allocation6], 1
    %11 = vsyncpa %s10, 0
    %12 = vsyncpa [#allocation4], 0
    %s13 = scalar_lea.sflag [#allocation4], 1
    %14 = vsyncpa %s13, 0
    loop: start=0, step=1, limit=4
    $region2: #{tpu_custom_call.1} parent=1 // loop_pre_header
      _
    $region3: #{tpu_custom_call.1} parent=1 // loop_header
      %s16 = sphi 0, %s20
      %p17 = scmp.ge.s32.totalorder %s16, 4
      %s23 = sphi 0, %s35
      %s24 = sphi 0, %s31
      %s25 = sphi 0, %s23
      %s26 = sphi 0, %s24
      %s27 = sphi 0, %s25
      %s28 = sphi 0, %s26
      %s38 = sphi 0, %s40
      %s41 = sphi 0, %s38
      %s42 = sphi 0, %s41
      %s58 = sphi 0, %s42
      %s64 = sphi 0, %s66
      %s67 = sphi 0, %s64
      %s68 = sphi 0, %s67
      %s84 = sphi 0, %s68
      %s90 = sphi 0, %s92
      %s93 = sphi 0, %s90
      %s94 = sphi 0, %s93
      %s110 = sphi 0, %s94
      %s118 = sphi 0, %s120
      %s121 = sphi 0, %s118
      %s122 = sphi 0, %s121
      %s138 = sphi 0, %s122
    $region4: #{tpu_custom_call.1} parent=1 // loop_header_branch
      %19 = sbr.rel (%p17) target = $region8
    $region5: #{tpu_custom_call.1} parent=1 // loop_body
      %s21 = ssub.s32 %s16, 1
      %s22 = ssub.s32 %s16, 2
      %s29 = sadd.s32 1, %s24
      %p30 = scmp.ge.s32.totalorder %s29, 2
      %s31 = scalar_select %p30, 0, %s29
      %s32 = sadd.s32 1, %s23
      %s33 = scalar_select %p30, %s32, %s23
      %p34 = scmp.ge.s32.totalorder %s33, 1
      %s35 = scalar_select %p34, 0, %s33
      %s36 = ssub.s32 %s23, %s35
      %p37 = scmp.eq.s32.totalorder %s36, 0
      %s39 = sadd.s32 %s38, 1
      %s40 = scalar_select %p37, %s38, %s39
      %p43 = pneg %p37
      %p44 = scmp.eq.s32.totalorder %s16, 1
      %p45 = por %p43, %p44
      %p46 = scmp.ne.s32.totalorder %s38, %s41
      %p47 = scmp.eq.s32.totalorder %s16, 0
      %p48 = por %p46, %p47
      %p49 = scmp.ne.s32.totalorder %s38, %s41
      %p50 = scmp.eq.s32.totalorder %s21, 1
      %p51 = por %p49, %p50
      %p52 = scmp.ne.s32.totalorder %s41, %s42
      %p53 = scmp.eq.s32.totalorder %s21, 0
      %p54 = por %p52, %p53
      %p55 = scmp.ne.s32.totalorder %s41, %s42
      %p56 = scmp.eq.s32.totalorder %s22, 1
      %p57 = por %p55, %p56
      %p59 = scmp.ne.s32.totalorder %s42, %s58
      %p60 = scmp.eq.s32.totalorder %s22, 0
      %p61 = por %p59, %p60
      %s62 = ssub.s32 %s24, %s31
      %p63 = scmp.eq.s32.totalorder %s62, 0
      %s65 = sadd.s32 %s64, 1
      %s66 = scalar_select %p63, %s64, %s65
      %p69 = pneg %p63
      %p70 = scmp.eq.s32.totalorder %s16, 1
      %p71 = por %p69, %p70
      %p72 = scmp.ne.s32.totalorder %s64, %s67
      %p73 = scmp.eq.s32.totalorder %s16, 0
      %p74 = por %p72, %p73
      %p75 = scmp.ne.s32.totalorder %s64, %s67
      %p76 = scmp.eq.s32.totalorder %s21, 1
      %p77 = por %p75, %p76
      %p78 = scmp.ne.s32.totalorder %s67, %s68
      %p79 = scmp.eq.s32.totalorder %s21, 0
      %p80 = por %p78, %p79
      %p81 = scmp.ne.s32.totalorder %s67, %s68
      %p82 = scmp.eq.s32.totalorder %s22, 1
      %p83 = por %p81, %p82
      %p85 = scmp.ne.s32.totalorder %s68, %s84
      %p86 = scmp.eq.s32.totalorder %s22, 0
      %p87 = por %p85, %p86
      %s88 = ssub.s32 %s24, %s31
      %p89 = scmp.eq.s32.totalorder %s88, 0
      %s91 = sadd.s32 %s90, 1
      %s92 = scalar_select %p89, %s90, %s91
      %p95 = pneg %p89
      %p96 = scmp.eq.s32.totalorder %s16, 1
      %p97 = por %p95, %p96
      %p98 = scmp.ne.s32.totalorder %s90, %s93
      %p99 = scmp.eq.s32.totalorder %s16, 0
      %p100 = por %p98, %p99
      %p101 = scmp.ne.s32.totalorder %s90, %s93
      %p102 = scmp.eq.s32.totalorder %s21, 1
      %p103 = por %p101, %p102
      %p104 = scmp.ne.s32.totalorder %s93, %s94
      %p105 = scmp.eq.s32.totalorder %s21, 0
      %p106 = por %p104, %p105
      %p107 = scmp.ne.s32.totalorder %s93, %s94
      %p108 = scmp.eq.s32.totalorder %s22, 1
      %p109 = por %p107, %p108
      %p111 = scmp.ne.s32.totalorder %s94, %s110
      %p112 = scmp.eq.s32.totalorder %s22, 0
      %p113 = por %p111, %p112
      %s114 = ssub.s32 %s23, %s35
      %s115 = ssub.s32 %s24, %s31
      %s116 = sor.u32 %s114, %s115
      %p117 = scmp.eq.s32.totalorder %s116, 0
      %s119 = sadd.s32 %s118, 1
      %s120 = scalar_select %p117, %s118, %s119
      %p123 = pneg %p117
      %p124 = scmp.eq.s32.totalorder %s16, 1
      %p125 = por %p123, %p124
      %p126 = scmp.ne.s32.totalorder %s118, %s121
      %p127 = scmp.eq.s32.totalorder %s16, 0
      %p128 = por %p126, %p127
      %p129 = scmp.ne.s32.totalorder %s118, %s121
      %p130 = scmp.eq.s32.totalorder %s21, 1
      %p131 = por %p129, %p130
      %p132 = scmp.ne.s32.totalorder %s121, %s122
      %p133 = scmp.eq.s32.totalorder %s21, 0
      %p134 = por %p132, %p133
      %p135 = scmp.ne.s32.totalorder %s121, %s122
      %p136 = scmp.eq.s32.totalorder %s22, 1
      %p137 = por %p135, %p136
      %p139 = scmp.ne.s32.totalorder %s122, %s138
      %p140 = scmp.eq.s32.totalorder %s22, 0
      %p141 = por %p139, %p140
      %p142 = scmp.le.s32.totalorder 1, %s16
      %p143 = scmp.lt.s32.totalorder %s16, 3
      %p144 = pnand %p142, %p143
      %p145 = pneg %p144
      // Predicated region
      $region9: #{tpu_custom_call.1} parent=5 // pred_check
        _
      $region10: #{tpu_custom_call.1} parent=5 // pred_check_branch
        %147 = sbr.rel (%p144) target = $region12
      $region11: #{tpu_custom_call.1} parent=5 // pred_region
        %s148 = ssub.s32 %s16, 1
        // Predicated region
        $region13: #{tpu_custom_call.1} parent=11 // pred_check
          %p149 = pneg %p54
        $region14: #{tpu_custom_call.1} parent=11 // pred_check_branch
          %151 = sbr.rel (%p149) target = $region16
        $region15: #{tpu_custom_call.1} parent=11 // pred_region
          %s152 = smul.u32 2, %s25
          %s154 = ssub.s32 512, 512
          %155 = vsyncadd [#allocation3], %s154
          %s156 = smul.addr %s152, 4
          %s157 = smul.addr %s156, 64
          %s158 = scalar_lea.hbm %s0, %s157
          %s159 = sshll.u32 [#allocation2], 4
          %s160 = int_to_ptr.vmem [resolvable:$true] %s159
          %165 = dma.hbm_to_vmem [thread:$0]  %s158, 512, %s160, [#allocation3], 256, 256, 16
        $region16: #{tpu_custom_call.1} parent=11 // pred_fallthru
          _
      $region12: #{tpu_custom_call.1} parent=5 // pred_fallthru
        _
      %p166 = scmp.lt.s32.totalorder %s16, 2
      // Predicated region
      $region17: #{tpu_custom_call.1} parent=5 // pred_check
        %p167 = pneg %p166
      $region18: #{tpu_custom_call.1} parent=5 // pred_check_branch
        %169 = sbr.rel (%p167) target = $region20
      $region19: #{tpu_custom_call.1} parent=5 // pred_region
        // Predicated region
        $region21: #{tpu_custom_call.1} parent=19 // pred_check
          %p170 = pneg %p74
        $region22: #{tpu_custom_call.1} parent=19 // pred_check_branch
          %172 = sbr.rel (%p170) target = $region24
        $region23: #{tpu_custom_call.1} parent=19 // pred_region
          %s173 = sand.u32 %s16, 1
          %s174 = scalar_lea.sflag [#allocation6], %s173
          %s175 = sand.u32 %s64, 1
          %s176 = smul.addr %s175, 2048
          %s177 = scalar_lea.vmem [#allocation5], %s176
          %s178 = smul.u32 8, %s24
          %s180 = ssub.s32 32768, 32768
          %181 = vsyncadd %s174, %s180
          %s182 = smul.addr %s178, 64
          %s183 = scalar_lea.hbm %s1, %s182
          %s184 = sshll.u32 %s177, 4
          %s185 = int_to_ptr.vmem [resolvable:$true] %s184
          %190 = dma.hbm_to_vmem [thread:$0]  %s183, 32768, %s185, %s174, 1024, 512, 32
        $region24: #{tpu_custom_call.1} parent=19 // pred_fallthru
          _
        // Predicated region
        $region25: #{tpu_custom_call.1} parent=19 // pred_check
          %p191 = pneg %p100
        $region26: #{tpu_custom_call.1} parent=19 // pred_check_branch
          %193 = sbr.rel (%p191) target = $region28
        $region27: #{tpu_custom_call.1} parent=19 // pred_region
          %s194 = sand.u32 %s16, 1
          %s195 = scalar_lea.sflag [#allocation6], %s194
          %s196 = sand.u32 %s90, 1
          %s197 = smul.addr %s196, 8
          %s198 = scalar_lea.vmem [#allocation7], %s197
          %s199 = smul.u32 8, %s24
          %s201 = ssub.s32 128, 128
          %202 = vsyncadd %s195, %s201
          %s203 = smul.addr %s199, 16
          %s204 = scalar_lea.hbm %s2, %s203
          %s206 = sshll.u32 %s198, 4
          %s207 = int_to_ptr.vmem [resolvable:$true] %s206
          %209 = dma.hbm_to_vmem [thread:$0]  %s204, 128, %s207, %s195
        $region28: #{tpu_custom_call.1} parent=19 // pred_fallthru
          _
      $region20: #{tpu_custom_call.1} parent=5 // pred_fallthru
        _
      %p210 = scmp.le.s32.totalorder 1, %s16
      %p211 = scmp.lt.s32.totalorder %s16, 3
      %p212 = pnand %p210, %p211
      %p213 = pneg %p212
      // Predicated region
      $region29: #{tpu_custom_call.1} parent=5 // pred_check
        _
      $region30: #{tpu_custom_call.1} parent=5 // pred_check_branch
        %215 = sbr.rel (%p212) target = $region32
      $region31: #{tpu_custom_call.1} parent=5 // pred_region
        %s216 = ssub.s32 %s16, 1
        // Predicated region
        $region33: #{tpu_custom_call.1} parent=31 // pred_check
          %p217 = pneg %p54
        $region34: #{tpu_custom_call.1} parent=31 // pred_check_branch
          %219 = sbr.rel (%p217) target = $region36
        $region35: #{tpu_custom_call.1} parent=31 // pred_region
          %220 = dma.done [#allocation3], 512
        $region36: #{tpu_custom_call.1} parent=31 // pred_fallthru
          _
        %s221 = sand.u32 %s21, 1
        %s222 = scalar_lea.sflag [#allocation6], %s221
        %s223 = sand.u32 %s67, 1
        %s224 = smul.addr %s223, 2048
        %s225 = scalar_lea.vmem [#allocation5], %s224
        // Predicated region
        $region37: #{tpu_custom_call.1} parent=31 // pred_check
          %p226 = pneg %p80
        $region38: #{tpu_custom_call.1} parent=31 // pred_check_branch
          %228 = sbr.rel (%p226) target = $region40
        $region39: #{tpu_custom_call.1} parent=31 // pred_region
          %229 = dma.done %s222, 32768
        $region40: #{tpu_custom_call.1} parent=31 // pred_fallthru
          _
        %s230 = sand.u32 %s21, 1
        %s231 = scalar_lea.sflag [#allocation6], %s230
        %s232 = sand.u32 %s93, 1
        %s233 = smul.addr %s232, 8
        %s234 = scalar_lea.vmem [#allocation7], %s233
        // Predicated region
        $region41: #{tpu_custom_call.1} parent=31 // pred_check
          %p235 = pneg %p106
        $region42: #{tpu_custom_call.1} parent=31 // pred_check_branch
          %237 = sbr.rel (%p235) target = $region44
        $region43: #{tpu_custom_call.1} parent=31 // pred_region
          %238 = dma.done %s231, 128
        $region44: #{tpu_custom_call.1} parent=31 // pred_fallthru
          _
        %p239 = pneg %p54
        %p240 = pneg %p51
        %s241 = sand.u32 %s21, 1
        %s242 = scalar_lea.sflag [#allocation6], %s241
        %s243 = sand.u32 %s67, 1
        %s244 = smul.addr %s243, 2048
        %s245 = scalar_lea.vmem [#allocation5], %s244
        %p246 = pneg %p80
        %p247 = pneg %p77
        %s248 = sand.u32 %s21, 1
        %s249 = scalar_lea.sflag [#allocation6], %s248
        %s250 = sand.u32 %s93, 1
        %s251 = smul.addr %s250, 8
        %s252 = scalar_lea.vmem [#allocation7], %s251
        %p253 = pneg %p106
        %p254 = pneg %p103
        %p255 = pneg %p134
        %p256 = pneg %p131
        %s257 = sand.u32 %s121, 1
        %s258 = scalar_lea.sflag [#allocation4], %s257
        %s259 = sand.u32 %s121, 1
        %s260 = smul.addr %s259, 128
        %s261 = scalar_lea.vmem [#allocation8], %s260
        %s262 = smul.u32 2, %s25
        %s263 = smul.u32 8, %s26
        %s264 = smul.u32 8, %s26
        %s265 = smul.u32 2, %s25
        %s266 = smul.u32 8, %s26
        %v267 = vld [vmem:[#allocation2] sm:$0xff]
        %v268 = vld [vmem:[#allocation2 + $0x8] sm:$0xff]
        %v269 = vld [vmem:[#allocation2 + $0x10] sm:$0xff]
        %v270 = vld [vmem:[#allocation2 + $0x18] sm:$0xff]
        %v271 = vld [vmem:[%s225] sm:$0xff]
        %v272 = vld [vmem:[%s225 + $0x8] sm:$0xff]
        %v273 = vld [vmem:[%s225 + $0x10] sm:$0xff]
        %v274 = vld [vmem:[%s225 + $0x18] sm:$0xff]
        %v275 = vld [vmem:[%s225 + $0x20] sm:$0xff]
        %v276 = vld [vmem:[%s225 + $0x28] sm:$0xff]
        %v277 = vld [vmem:[%s225 + $0x30] sm:$0xff]
        %v278 = vld [vmem:[%s225 + $0x38] sm:$0xff]
        %v279 = vld [vmem:[%s225 + $0x40] sm:$0xff]
        %v280 = vld [vmem:[%s225 + $0x48] sm:$0xff]
        %v281 = vld [vmem:[%s225 + $0x50] sm:$0xff]
        %v282 = vld [vmem:[%s225 + $0x58] sm:$0xff]
        %v283 = vld [vmem:[%s225 + $0x60] sm:$0xff]
        %v284 = vld [vmem:[%s225 + $0x68] sm:$0xff]
        %v285 = vld [vmem:[%s225 + $0x70] sm:$0xff]
        %v286 = vld [vmem:[%s225 + $0x78] sm:$0xff]
        %v287 = vld [vmem:[%s225 + $0x80] sm:$0xff]
        %v288 = vld [vmem:[%s225 + $0x88] sm:$0xff]
        %v289 = vld [vmem:[%s225 + $0x90] sm:$0xff]
        %v290 = vld [vmem:[%s225 + $0x98] sm:$0xff]
        %v291 = vld [vmem:[%s225 + $0xa0] sm:$0xff]
        %v292 = vld [vmem:[%s225 + $0xa8] sm:$0xff]
        %v293 = vld [vmem:[%s225 + $0xb0] sm:$0xff]
        %v294 = vld [vmem:[%s225 + $0xb8] sm:$0xff]
        %v295 = vld [vmem:[%s225 + $0xc0] sm:$0xff]
        %v296 = vld [vmem:[%s225 + $0xc8] sm:$0xff]
        %v297 = vld [vmem:[%s225 + $0xd0] sm:$0xff]
        %v298 = vld [vmem:[%s225 + $0xd8] sm:$0xff]
        %v299 = vld [vmem:[%s225 + $0xe0] sm:$0xff]
        %v300 = vld [vmem:[%s225 + $0xe8] sm:$0xff]
        %v301 = vld [vmem:[%s225 + $0xf0] sm:$0xff]
        %v302 = vld [vmem:[%s225 + $0xf8] sm:$0xff]
        %v303 = vld [vmem:[%s225 + $0x100] sm:$0xff]
        %v304 = vld [vmem:[%s225 + $0x108] sm:$0xff]
        %v305 = vld [vmem:[%s225 + $0x110] sm:$0xff]
        %v306 = vld [vmem:[%s225 + $0x118] sm:$0xff]
        %v307 = vld [vmem:[%s225 + $0x120] sm:$0xff]
        %v308 = vld [vmem:[%s225 + $0x128] sm:$0xff]
        %v309 = vld [vmem:[%s225 + $0x130] sm:$0xff]
        %v310 = vld [vmem:[%s225 + $0x138] sm:$0xff]
        %v311 = vld [vmem:[%s225 + $0x140] sm:$0xff]
        %v312 = vld [vmem:[%s225 + $0x148] sm:$0xff]
        %v313 = vld [vmem:[%s225 + $0x150] sm:$0xff]
        %v314 = vld [vmem:[%s225 + $0x158] sm:$0xff]
        %v315 = vld [vmem:[%s225 + $0x160] sm:$0xff]
        %v316 = vld [vmem:[%s225 + $0x168] sm:$0xff]
        %v317 = vld [vmem:[%s225 + $0x170] sm:$0xff]
        %v318 = vld [vmem:[%s225 + $0x178] sm:$0xff]
        %v319 = vld [vmem:[%s225 + $0x180] sm:$0xff]
        %v320 = vld [vmem:[%s225 + $0x188] sm:$0xff]
        %v321 = vld [vmem:[%s225 + $0x190] sm:$0xff]
        %v322 = vld [vmem:[%s225 + $0x198] sm:$0xff]
        %v323 = vld [vmem:[%s225 + $0x1a0] sm:$0xff]
        %v324 = vld [vmem:[%s225 + $0x1a8] sm:$0xff]
        %v325 = vld [vmem:[%s225 + $0x1b0] sm:$0xff]
        %v326 = vld [vmem:[%s225 + $0x1b8] sm:$0xff]
        %v327 = vld [vmem:[%s225 + $0x1c0] sm:$0xff]
        %v328 = vld [vmem:[%s225 + $0x1c8] sm:$0xff]
        %v329 = vld [vmem:[%s225 + $0x1d0] sm:$0xff]
        %v330 = vld [vmem:[%s225 + $0x1d8] sm:$0xff]
        %v331 = vld [vmem:[%s225 + $0x1e0] sm:$0xff]
        %v332 = vld [vmem:[%s225 + $0x1e8] sm:$0xff]
        %v333 = vld [vmem:[%s225 + $0x1f0] sm:$0xff]
        %v334 = vld [vmem:[%s225 + $0x1f8] sm:$0xff]
        %v335 = vld [vmem:[%s225 + $0x200] sm:$0xff]
        %v336 = vld [vmem:[%s225 + $0x208] sm:$0xff]
        %v337 = vld [vmem:[%s225 + $0x210] sm:$0xff]
        %v338 = vld [vmem:[%s225 + $0x218] sm:$0xff]
        %v339 = vld [vmem:[%s225 + $0x220] sm:$0xff]
        %v340 = vld [vmem:[%s225 + $0x228] sm:$0xff]
        %v341 = vld [vmem:[%s225 + $0x230] sm:$0xff]
        %v342 = vld [vmem:[%s225 + $0x238] sm:$0xff]
        %v343 = vld [vmem:[%s225 + $0x240] sm:$0xff]
        %v344 = vld [vmem:[%s225 + $0x248] sm:$0xff]
        %v345 = vld [vmem:[%s225 + $0x250] sm:$0xff]
        %v346 = vld [vmem:[%s225 + $0x258] sm:$0xff]
        %v347 = vld [vmem:[%s225 + $0x260] sm:$0xff]
        %v348 = vld [vmem:[%s225 + $0x268] sm:$0xff]
        %v349 = vld [vmem:[%s225 + $0x270] sm:$0xff]
        %v350 = vld [vmem:[%s225 + $0x278] sm:$0xff]
        %v351 = vld [vmem:[%s225 + $0x280] sm:$0xff]
        %v352 = vld [vmem:[%s225 + $0x288] sm:$0xff]
        %v353 = vld [vmem:[%s225 + $0x290] sm:$0xff]
        %v354 = vld [vmem:[%s225 + $0x298] sm:$0xff]
        %v355 = vld [vmem:[%s225 + $0x2a0] sm:$0xff]
        %v356 = vld [vmem:[%s225 + $0x2a8] sm:$0xff]
        %v357 = vld [vmem:[%s225 + $0x2b0] sm:$0xff]
        %v358 = vld [vmem:[%s225 + $0x2b8] sm:$0xff]
        %v359 = vld [vmem:[%s225 + $0x2c0] sm:$0xff]
        %v360 = vld [vmem:[%s225 + $0x2c8] sm:$0xff]
        %v361 = vld [vmem:[%s225 + $0x2d0] sm:$0xff]
        %v362 = vld [vmem:[%s225 + $0x2d8] sm:$0xff]
        %v363 = vld [vmem:[%s225 + $0x2e0] sm:$0xff]
        %v364 = vld [vmem:[%s225 + $0x2e8] sm:$0xff]
        %v365 = vld [vmem:[%s225 + $0x2f0] sm:$0xff]
        %v366 = vld [vmem:[%s225 + $0x2f8] sm:$0xff]
        %v367 = vld [vmem:[%s225 + $0x300] sm:$0xff]
        %v368 = vld [vmem:[%s225 + $0x308] sm:$0xff]
        %v369 = vld [vmem:[%s225 + $0x310] sm:$0xff]
        %v370 = vld [vmem:[%s225 + $0x318] sm:$0xff]
        %v371 = vld [vmem:[%s225 + $0x320] sm:$0xff]
        %v372 = vld [vmem:[%s225 + $0x328] sm:$0xff]
        %v373 = vld [vmem:[%s225 + $0x330] sm:$0xff]
        %v374 = vld [vmem:[%s225 + $0x338] sm:$0xff]
        %v375 = vld [vmem:[%s225 + $0x340] sm:$0xff]
        %v376 = vld [vmem:[%s225 + $0x348] sm:$0xff]
        %v377 = vld [vmem:[%s225 + $0x350] sm:$0xff]
        %v378 = vld [vmem:[%s225 + $0x358] sm:$0xff]
        %v379 = vld [vmem:[%s225 + $0x360] sm:$0xff]
        %v380 = vld [vmem:[%s225 + $0x368] sm:$0xff]
        %v381 = vld [vmem:[%s225 + $0x370] sm:$0xff]
        %v382 = vld [vmem:[%s225 + $0x378] sm:$0xff]
        %v383 = vld [vmem:[%s225 + $0x380] sm:$0xff]
        %v384 = vld [vmem:[%s225 + $0x388] sm:$0xff]
        %v385 = vld [vmem:[%s225 + $0x390] sm:$0xff]
        %v386 = vld [vmem:[%s225 + $0x398] sm:$0xff]
        %v387 = vld [vmem:[%s225 + $0x3a0] sm:$0xff]
        %v388 = vld [vmem:[%s225 + $0x3a8] sm:$0xff]
        %v389 = vld [vmem:[%s225 + $0x3b0] sm:$0xff]
        %v390 = vld [vmem:[%s225 + $0x3b8] sm:$0xff]
        %v391 = vld [vmem:[%s225 + $0x3c0] sm:$0xff]
        %v392 = vld [vmem:[%s225 + $0x3c8] sm:$0xff]
        %v393 = vld [vmem:[%s225 + $0x3d0] sm:$0xff]
        %v394 = vld [vmem:[%s225 + $0x3d8] sm:$0xff]
        %v395 = vld [vmem:[%s225 + $0x3e0] sm:$0xff]
        %v396 = vld [vmem:[%s225 + $0x3e8] sm:$0xff]
        %v397 = vld [vmem:[%s225 + $0x3f0] sm:$0xff]
        %v398 = vld [vmem:[%s225 + $0x3f8] sm:$0xff]
        %v399 = vld [vmem:[%s225 + $0x400] sm:$0xff]
        %v400 = vld [vmem:[%s225 + $0x408] sm:$0xff]
        %v401 = vld [vmem:[%s225 + $0x410] sm:$0xff]
        %v402 = vld [vmem:[%s225 + $0x418] sm:$0xff]
        %v403 = vld [vmem:[%s225 + $0x420] sm:$0xff]
        %v404 = vld [vmem:[%s225 + $0x428] sm:$0xff]
        %v405 = vld [vmem:[%s225 + $0x430] sm:$0xff]
        %v406 = vld [vmem:[%s225 + $0x438] sm:$0xff]
        %v407 = vld [vmem:[%s225 + $0x440] sm:$0xff]
        %v408 = vld [vmem:[%s225 + $0x448] sm:$0xff]
        %v409 = vld [vmem:[%s225 + $0x450] sm:$0xff]
        %v410 = vld [vmem:[%s225 + $0x458] sm:$0xff]
        %v411 = vld [vmem:[%s225 + $0x460] sm:$0xff]
        %v412 = vld [vmem:[%s225 + $0x468] sm:$0xff]
        %v413 = vld [vmem:[%s225 + $0x470] sm:$0xff]
        %v414 = vld [vmem:[%s225 + $0x478] sm:$0xff]
        %v415 = vld [vmem:[%s225 + $0x480] sm:$0xff]
        %v416 = vld [vmem:[%s225 + $0x488] sm:$0xff]
        %v417 = vld [vmem:[%s225 + $0x490] sm:$0xff]
        %v418 = vld [vmem:[%s225 + $0x498] sm:$0xff]
        %v419 = vld [vmem:[%s225 + $0x4a0] sm:$0xff]
        %v420 = vld [vmem:[%s225 + $0x4a8] sm:$0xff]
        %v421 = vld [vmem:[%s225 + $0x4b0] sm:$0xff]
        %v422 = vld [vmem:[%s225 + $0x4b8] sm:$0xff]
        %v423 = vld [vmem:[%s225 + $0x4c0] sm:$0xff]
        %v424 = vld [vmem:[%s225 + $0x4c8] sm:$0xff]
        %v425 = vld [vmem:[%s225 + $0x4d0] sm:$0xff]
        %v426 = vld [vmem:[%s225 + $0x4d8] sm:$0xff]
        %v427 = vld [vmem:[%s225 + $0x4e0] sm:$0xff]
        %v428 = vld [vmem:[%s225 + $0x4e8] sm:$0xff]
        %v429 = vld [vmem:[%s225 + $0x4f0] sm:$0xff]
        %v430 = vld [vmem:[%s225 + $0x4f8] sm:$0xff]
        %v431 = vld [vmem:[%s225 + $0x500] sm:$0xff]
        %v432 = vld [vmem:[%s225 + $0x508] sm:$0xff]
        %v433 = vld [vmem:[%s225 + $0x510] sm:$0xff]
        %v434 = vld [vmem:[%s225 + $0x518] sm:$0xff]
        %v435 = vld [vmem:[%s225 + $0x520] sm:$0xff]
        %v436 = vld [vmem:[%s225 + $0x528] sm:$0xff]
        %v437 = vld [vmem:[%s225 + $0x530] sm:$0xff]
        %v438 = vld [vmem:[%s225 + $0x538] sm:$0xff]
        %v439 = vld [vmem:[%s225 + $0x540] sm:$0xff]
        %v440 = vld [vmem:[%s225 + $0x548] sm:$0xff]
        %v441 = vld [vmem:[%s225 + $0x550] sm:$0xff]
        %v442 = vld [vmem:[%s225 + $0x558] sm:$0xff]
        %v443 = vld [vmem:[%s225 + $0x560] sm:$0xff]
        %v444 = vld [vmem:[%s225 + $0x568] sm:$0xff]
        %v445 = vld [vmem:[%s225 + $0x570] sm:$0xff]
        %v446 = vld [vmem:[%s225 + $0x578] sm:$0xff]
        %v447 = vld [vmem:[%s225 + $0x580] sm:$0xff]
        %v448 = vld [vmem:[%s225 + $0x588] sm:$0xff]
        %v449 = vld [vmem:[%s225 + $0x590] sm:$0xff]
        %v450 = vld [vmem:[%s225 + $0x598] sm:$0xff]
        %v451 = vld [vmem:[%s225 + $0x5a0] sm:$0xff]
        %v452 = vld [vmem:[%s225 + $0x5a8] sm:$0xff]
        %v453 = vld [vmem:[%s225 + $0x5b0] sm:$0xff]
        %v454 = vld [vmem:[%s225 + $0x5b8] sm:$0xff]
        %v455 = vld [vmem:[%s225 + $0x5c0] sm:$0xff]
        %v456 = vld [vmem:[%s225 + $0x5c8] sm:$0xff]
        %v457 = vld [vmem:[%s225 + $0x5d0] sm:$0xff]
        %v458 = vld [vmem:[%s225 + $0x5d8] sm:$0xff]
        %v459 = vld [vmem:[%s225 + $0x5e0] sm:$0xff]
        %v460 = vld [vmem:[%s225 + $0x5e8] sm:$0xff]
        %v461 = vld [vmem:[%s225 + $0x5f0] sm:$0xff]
        %v462 = vld [vmem:[%s225 + $0x5f8] sm:$0xff]
        %v463 = vld [vmem:[%s225 + $0x600] sm:$0xff]
        %v464 = vld [vmem:[%s225 + $0x608] sm:$0xff]
        %v465 = vld [vmem:[%s225 + $0x610] sm:$0xff]
        %v466 = vld [vmem:[%s225 + $0x618] sm:$0xff]
        %v467 = vld [vmem:[%s225 + $0x620] sm:$0xff]
        %v468 = vld [vmem:[%s225 + $0x628] sm:$0xff]
        %v469 = vld [vmem:[%s225 + $0x630] sm:$0xff]
        %v470 = vld [vmem:[%s225 + $0x638] sm:$0xff]
        %v471 = vld [vmem:[%s225 + $0x640] sm:$0xff]
        %v472 = vld [vmem:[%s225 + $0x648] sm:$0xff]
        %v473 = vld [vmem:[%s225 + $0x650] sm:$0xff]
        %v474 = vld [vmem:[%s225 + $0x658] sm:$0xff]
        %v475 = vld [vmem:[%s225 + $0x660] sm:$0xff]
        %v476 = vld [vmem:[%s225 + $0x668] sm:$0xff]
        %v477 = vld [vmem:[%s225 + $0x670] sm:$0xff]
        %v478 = vld [vmem:[%s225 + $0x678] sm:$0xff]
        %v479 = vld [vmem:[%s225 + $0x680] sm:$0xff]
        %v480 = vld [vmem:[%s225 + $0x688] sm:$0xff]
        %v481 = vld [vmem:[%s225 + $0x690] sm:$0xff]
        %v482 = vld [vmem:[%s225 + $0x698] sm:$0xff]
        %v483 = vld [vmem:[%s225 + $0x6a0] sm:$0xff]
        %v484 = vld [vmem:[%s225 + $0x6a8] sm:$0xff]
        %v485 = vld [vmem:[%s225 + $0x6b0] sm:$0xff]
        %v486 = vld [vmem:[%s225 + $0x6b8] sm:$0xff]
        %v487 = vld [vmem:[%s225 + $0x6c0] sm:$0xff]
        %v488 = vld [vmem:[%s225 + $0x6c8] sm:$0xff]
        %v489 = vld [vmem:[%s225 + $0x6d0] sm:$0xff]
        %v490 = vld [vmem:[%s225 + $0x6d8] sm:$0xff]
        %v491 = vld [vmem:[%s225 + $0x6e0] sm:$0xff]
        %v492 = vld [vmem:[%s225 + $0x6e8] sm:$0xff]
        %v493 = vld [vmem:[%s225 + $0x6f0] sm:$0xff]
        %v494 = vld [vmem:[%s225 + $0x6f8] sm:$0xff]
        %v495 = vld [vmem:[%s225 + $0x700] sm:$0xff]
        %v496 = vld [vmem:[%s225 + $0x708] sm:$0xff]
        %v497 = vld [vmem:[%s225 + $0x710] sm:$0xff]
        %v498 = vld [vmem:[%s225 + $0x718] sm:$0xff]
        %v499 = vld [vmem:[%s225 + $0x720] sm:$0xff]
        %v500 = vld [vmem:[%s225 + $0x728] sm:$0xff]
        %v501 = vld [vmem:[%s225 + $0x730] sm:$0xff]
        %v502 = vld [vmem:[%s225 + $0x738] sm:$0xff]
        %v503 = vld [vmem:[%s225 + $0x740] sm:$0xff]
        %v504 = vld [vmem:[%s225 + $0x748] sm:$0xff]
        %v505 = vld [vmem:[%s225 + $0x750] sm:$0xff]
        %v506 = vld [vmem:[%s225 + $0x758] sm:$0xff]
        %v507 = vld [vmem:[%s225 + $0x760] sm:$0xff]
        %v508 = vld [vmem:[%s225 + $0x768] sm:$0xff]
        %v509 = vld [vmem:[%s225 + $0x770] sm:$0xff]
        %v510 = vld [vmem:[%s225 + $0x778] sm:$0xff]
        %v511 = vld [vmem:[%s225 + $0x780] sm:$0xff]
        %v512 = vld [vmem:[%s225 + $0x788] sm:$0xff]
        %v513 = vld [vmem:[%s225 + $0x790] sm:$0xff]
        %v514 = vld [vmem:[%s225 + $0x798] sm:$0xff]
        %v515 = vld [vmem:[%s225 + $0x7a0] sm:$0xff]
        %v516 = vld [vmem:[%s225 + $0x7a8] sm:$0xff]
        %v517 = vld [vmem:[%s225 + $0x7b0] sm:$0xff]
        %v518 = vld [vmem:[%s225 + $0x7b8] sm:$0xff]
        %v519 = vld [vmem:[%s225 + $0x7c0] sm:$0xff]
        %v520 = vld [vmem:[%s225 + $0x7c8] sm:$0xff]
        %v521 = vld [vmem:[%s225 + $0x7d0] sm:$0xff]
        %v522 = vld [vmem:[%s225 + $0x7d8] sm:$0xff]
        %v523 = vld [vmem:[%s225 + $0x7e0] sm:$0xff]
        %v524 = vld [vmem:[%s225 + $0x7e8] sm:$0xff]
        %v525 = vld [vmem:[%s225 + $0x7f0] sm:$0xff]
        %v526 = vld [vmem:[%s225 + $0x7f8] sm:$0xff]
        %v527 = vld [vmem:[%s234] sm:$0xff]
        %v529 = vlaneseq
        %v530 = vshrl.u32 %v529, 7
        %v531 = vsub.s32 0, %v530
        %v532 = vrot.slane %v527, %v531
        %v533 = vlaneseq
        %v534 = vshrl.u32 %v533, 7
        %v535 = vsub.s32 1, %v534
        %v536 = vrot.slane %v527, %v535
        %v537 = vlaneseq
        %v538 = vshrl.u32 %v537, 7
        %v539 = vsub.s32 2, %v538
        %v540 = vrot.slane %v527, %v539
        %v541 = vlaneseq
        %v542 = vshrl.u32 %v541, 7
        %v543 = vsub.s32 3, %v542
        %v544 = vrot.slane %v527, %v543
        %v545 = vlaneseq
        %v546 = vshrl.u32 %v545, 7
        %v547 = vsub.s32 4, %v546
        %v548 = vrot.slane %v527, %v547
        %v549 = vlaneseq
        %v550 = vshrl.u32 %v549, 7
        %v551 = vsub.s32 5, %v550
        %v552 = vrot.slane %v527, %v551
        %v553 = vlaneseq
        %v554 = vshrl.u32 %v553, 7
        %v555 = vsub.s32 6, %v554
        %v556 = vrot.slane %v527, %v555
        %v557 = vlaneseq
        %v558 = vshrl.u32 %v557, 7
        %v559 = vsub.s32 7, %v558
        %v560 = vrot.slane %v527, %v559
        %v573 = vunpack.c.l.b16 %v267
        %v574 = vunpack.c.h.b16 %v267
        %v575 = vunpack.c.l.b16 %v268
        %v576 = vunpack.c.h.b16 %v268
        %v577 = vunpack.c.l.b16 %v269
        %v578 = vunpack.c.h.b16 %v269
        %v579 = vunpack.c.l.b16 %v270
        %v580 = vunpack.c.h.b16 %v270
        %v581 = vpack.c.b16 %v577, %v573
        %v582 = vpack.c.b16 %v578, %v574
        %v583 = vpack.c.b16 %v579, %v575
        %v584 = vpack.c.b16 %v580, %v576
        %v845 = vunpack.c.l.b16 %v271
        %v846 = vunpack.c.h.b16 %v271
        %v847 = vunpack.c.l.b16 %v272
        %v848 = vunpack.c.h.b16 %v272
        %v849 = vunpack.c.l.b16 %v273
        %v850 = vunpack.c.h.b16 %v273
        %v851 = vunpack.c.l.b16 %v274
        %v852 = vunpack.c.h.b16 %v274
        %v853 = vunpack.c.l.b16 %v275
        %v854 = vunpack.c.h.b16 %v275
        %v855 = vunpack.c.l.b16 %v276
        %v856 = vunpack.c.h.b16 %v276
        %v857 = vunpack.c.l.b16 %v277
        %v858 = vunpack.c.h.b16 %v277
        %v859 = vunpack.c.l.b16 %v278
        %v860 = vunpack.c.h.b16 %v278
        %v861 = vunpack.c.l.b16 %v279
        %v862 = vunpack.c.h.b16 %v279
        %v863 = vunpack.c.l.b16 %v280
        %v864 = vunpack.c.h.b16 %v280
        %v865 = vunpack.c.l.b16 %v281
        %v866 = vunpack.c.h.b16 %v281
        %v867 = vunpack.c.l.b16 %v282
        %v868 = vunpack.c.h.b16 %v282
        %v869 = vunpack.c.l.b16 %v283
        %v870 = vunpack.c.h.b16 %v283
        %v871 = vunpack.c.l.b16 %v284
        %v872 = vunpack.c.h.b16 %v284
        %v873 = vunpack.c.l.b16 %v285
        %v874 = vunpack.c.h.b16 %v285
        %v875 = vunpack.c.l.b16 %v286
        %v876 = vunpack.c.h.b16 %v286
        %v877 = vunpack.c.l.b16 %v287
        %v878 = vunpack.c.h.b16 %v287
        %v879 = vunpack.c.l.b16 %v288
        %v880 = vunpack.c.h.b16 %v288
        %v881 = vunpack.c.l.b16 %v289
        %v882 = vunpack.c.h.b16 %v289
        %v883 = vunpack.c.l.b16 %v290
        %v884 = vunpack.c.h.b16 %v290
        %v885 = vunpack.c.l.b16 %v291
        %v886 = vunpack.c.h.b16 %v291
        %v887 = vunpack.c.l.b16 %v292
        %v888 = vunpack.c.h.b16 %v292
        %v889 = vunpack.c.l.b16 %v293
        %v890 = vunpack.c.h.b16 %v293
        %v891 = vunpack.c.l.b16 %v294
        %v892 = vunpack.c.h.b16 %v294
        %v893 = vunpack.c.l.b16 %v295
        %v894 = vunpack.c.h.b16 %v295
        %v895 = vunpack.c.l.b16 %v296
        %v896 = vunpack.c.h.b16 %v296
        %v897 = vunpack.c.l.b16 %v297
        %v898 = vunpack.c.h.b16 %v297
        %v899 = vunpack.c.l.b16 %v298
        %v900 = vunpack.c.h.b16 %v298
        %v901 = vunpack.c.l.b16 %v299
        %v902 = vunpack.c.h.b16 %v299
        %v903 = vunpack.c.l.b16 %v300
        %v904 = vunpack.c.h.b16 %v300
        %v905 = vunpack.c.l.b16 %v301
        %v906 = vunpack.c.h.b16 %v301
        %v907 = vunpack.c.l.b16 %v302
        %v908 = vunpack.c.h.b16 %v302
        %v909 = vunpack.c.l.b16 %v303
        %v910 = vunpack.c.h.b16 %v303
        %v911 = vunpack.c.l.b16 %v304
        %v912 = vunpack.c.h.b16 %v304
        %v913 = vunpack.c.l.b16 %v305
        %v914 = vunpack.c.h.b16 %v305
        %v915 = vunpack.c.l.b16 %v306
        %v916 = vunpack.c.h.b16 %v306
        %v917 = vunpack.c.l.b16 %v307
        %v918 = vunpack.c.h.b16 %v307
        %v919 = vunpack.c.l.b16 %v308
        %v920 = vunpack.c.h.b16 %v308
        %v921 = vunpack.c.l.b16 %v309
        %v922 = vunpack.c.h.b16 %v309
        %v923 = vunpack.c.l.b16 %v310
        %v924 = vunpack.c.h.b16 %v310
        %v925 = vunpack.c.l.b16 %v311
        %v926 = vunpack.c.h.b16 %v311
        %v927 = vunpack.c.l.b16 %v312
        %v928 = vunpack.c.h.b16 %v312
        %v929 = vunpack.c.l.b16 %v313
        %v930 = vunpack.c.h.b16 %v313
        %v931 = vunpack.c.l.b16 %v314
        %v932 = vunpack.c.h.b16 %v314
        %v933 = vunpack.c.l.b16 %v315
        %v934 = vunpack.c.h.b16 %v315
        %v935 = vunpack.c.l.b16 %v316
        %v936 = vunpack.c.h.b16 %v316
        %v937 = vunpack.c.l.b16 %v317
        %v938 = vunpack.c.h.b16 %v317
        %v939 = vunpack.c.l.b16 %v318
        %v940 = vunpack.c.h.b16 %v318
        %v941 = vunpack.c.l.b16 %v319
        %v942 = vunpack.c.h.b16 %v319
        %v943 = vunpack.c.l.b16 %v320
        %v944 = vunpack.c.h.b16 %v320
        %v945 = vunpack.c.l.b16 %v321
        %v946 = vunpack.c.h.b16 %v321
        %v947 = vunpack.c.l.b16 %v322
        %v948 = vunpack.c.h.b16 %v322
        %v949 = vunpack.c.l.b16 %v323
        %v950 = vunpack.c.h.b16 %v323
        %v951 = vunpack.c.l.b16 %v324
        %v952 = vunpack.c.h.b16 %v324
        %v953 = vunpack.c.l.b16 %v325
        %v954 = vunpack.c.h.b16 %v325
        %v955 = vunpack.c.l.b16 %v326
        %v956 = vunpack.c.h.b16 %v326
        %v957 = vunpack.c.l.b16 %v327
        %v958 = vunpack.c.h.b16 %v327
        %v959 = vunpack.c.l.b16 %v328
        %v960 = vunpack.c.h.b16 %v328
        %v961 = vunpack.c.l.b16 %v329
        %v962 = vunpack.c.h.b16 %v329
        %v963 = vunpack.c.l.b16 %v330
        %v964 = vunpack.c.h.b16 %v330
        %v965 = vunpack.c.l.b16 %v331
        %v966 = vunpack.c.h.b16 %v331
        %v967 = vunpack.c.l.b16 %v332
        %v968 = vunpack.c.h.b16 %v332
        %v969 = vunpack.c.l.b16 %v333
        %v970 = vunpack.c.h.b16 %v333
        %v971 = vunpack.c.l.b16 %v334
        %v972 = vunpack.c.h.b16 %v334
        %v973 = vunpack.c.l.b16 %v335
        %v974 = vunpack.c.h.b16 %v335
        %v975 = vunpack.c.l.b16 %v336
        %v976 = vunpack.c.h.b16 %v336
        %v977 = vunpack.c.l.b16 %v337
        %v978 = vunpack.c.h.b16 %v337
        %v979 = vunpack.c.l.b16 %v338
        %v980 = vunpack.c.h.b16 %v338
        %v981 = vunpack.c.l.b16 %v339
        %v982 = vunpack.c.h.b16 %v339
        %v983 = vunpack.c.l.b16 %v340
        %v984 = vunpack.c.h.b16 %v340
        %v985 = vunpack.c.l.b16 %v341
        %v986 = vunpack.c.h.b16 %v341
        %v987 = vunpack.c.l.b16 %v342
        %v988 = vunpack.c.h.b16 %v342
        %v989 = vunpack.c.l.b16 %v343
        %v990 = vunpack.c.h.b16 %v343
        %v991 = vunpack.c.l.b16 %v344
        %v992 = vunpack.c.h.b16 %v344
        %v993 = vunpack.c.l.b16 %v345
        %v994 = vunpack.c.h.b16 %v345
        %v995 = vunpack.c.l.b16 %v346
        %v996 = vunpack.c.h.b16 %v346
        %v997 = vunpack.c.l.b16 %v347
        %v998 = vunpack.c.h.b16 %v347
        %v999 = vunpack.c.l.b16 %v348
        %v1000 = vunpack.c.h.b16 %v348
        %v1001 = vunpack.c.l.b16 %v349
        %v1002 = vunpack.c.h.b16 %v349
        %v1003 = vunpack.c.l.b16 %v350
        %v1004 = vunpack.c.h.b16 %v350
        %v1005 = vunpack.c.l.b16 %v351
        %v1006 = vunpack.c.h.b16 %v351
        %v1007 = vunpack.c.l.b16 %v352
        %v1008 = vunpack.c.h.b16 %v352
        %v1009 = vunpack.c.l.b16 %v353
        %v1010 = vunpack.c.h.b16 %v353
        %v1011 = vunpack.c.l.b16 %v354
        %v1012 = vunpack.c.h.b16 %v354
        %v1013 = vunpack.c.l.b16 %v355
        %v1014 = vunpack.c.h.b16 %v355
        %v1015 = vunpack.c.l.b16 %v356
        %v1016 = vunpack.c.h.b16 %v356
        %v1017 = vunpack.c.l.b16 %v357
        %v1018 = vunpack.c.h.b16 %v357
        %v1019 = vunpack.c.l.b16 %v358
        %v1020 = vunpack.c.h.b16 %v358
        %v1021 = vunpack.c.l.b16 %v359
        %v1022 = vunpack.c.h.b16 %v359
        %v1023 = vunpack.c.l.b16 %v360
        %v1024 = vunpack.c.h.b16 %v360
        %v1025 = vunpack.c.l.b16 %v361
        %v1026 = vunpack.c.h.b16 %v361
        %v1027 = vunpack.c.l.b16 %v362
        %v1028 = vunpack.c.h.b16 %v362
        %v1029 = vunpack.c.l.b16 %v363
        %v1030 = vunpack.c.h.b16 %v363
        %v1031 = vunpack.c.l.b16 %v364
        %v1032 = vunpack.c.h.b16 %v364
        %v1033 = vunpack.c.l.b16 %v365
        %v1034 = vunpack.c.h.b16 %v365
        %v1035 = vunpack.c.l.b16 %v366
        %v1036 = vunpack.c.h.b16 %v366
        %v1037 = vunpack.c.l.b16 %v367
        %v1038 = vunpack.c.h.b16 %v367
        %v1039 = vunpack.c.l.b16 %v368
        %v1040 = vunpack.c.h.b16 %v368
        %v1041 = vunpack.c.l.b16 %v369
        %v1042 = vunpack.c.h.b16 %v369
        %v1043 = vunpack.c.l.b16 %v370
        %v1044 = vunpack.c.h.b16 %v370
        %v1045 = vunpack.c.l.b16 %v371
        %v1046 = vunpack.c.h.b16 %v371
        %v1047 = vunpack.c.l.b16 %v372
        %v1048 = vunpack.c.h.b16 %v372
        %v1049 = vunpack.c.l.b16 %v373
        %v1050 = vunpack.c.h.b16 %v373
        %v1051 = vunpack.c.l.b16 %v374
        %v1052 = vunpack.c.h.b16 %v374
        %v1053 = vunpack.c.l.b16 %v375
        %v1054 = vunpack.c.h.b16 %v375
        %v1055 = vunpack.c.l.b16 %v376
        %v1056 = vunpack.c.h.b16 %v376
        %v1057 = vunpack.c.l.b16 %v377
        %v1058 = vunpack.c.h.b16 %v377
        %v1059 = vunpack.c.l.b16 %v378
        %v1060 = vunpack.c.h.b16 %v378
        %v1061 = vunpack.c.l.b16 %v379
        %v1062 = vunpack.c.h.b16 %v379
        %v1063 = vunpack.c.l.b16 %v380
        %v1064 = vunpack.c.h.b16 %v380
        %v1065 = vunpack.c.l.b16 %v381
        %v1066 = vunpack.c.h.b16 %v381
        %v1067 = vunpack.c.l.b16 %v382
        %v1068 = vunpack.c.h.b16 %v382
        %v1069 = vunpack.c.l.b16 %v383
        %v1070 = vunpack.c.h.b16 %v383
        %v1071 = vunpack.c.l.b16 %v384
        %v1072 = vunpack.c.h.b16 %v384
        %v1073 = vunpack.c.l.b16 %v385
        %v1074 = vunpack.c.h.b16 %v385
        %v1075 = vunpack.c.l.b16 %v386
        %v1076 = vunpack.c.h.b16 %v386
        %v1077 = vunpack.c.l.b16 %v387
        %v1078 = vunpack.c.h.b16 %v387
        %v1079 = vunpack.c.l.b16 %v388
        %v1080 = vunpack.c.h.b16 %v388
        %v1081 = vunpack.c.l.b16 %v389
        %v1082 = vunpack.c.h.b16 %v389
        %v1083 = vunpack.c.l.b16 %v390
        %v1084 = vunpack.c.h.b16 %v390
        %v1085 = vunpack.c.l.b16 %v391
        %v1086 = vunpack.c.h.b16 %v391
        %v1087 = vunpack.c.l.b16 %v392
        %v1088 = vunpack.c.h.b16 %v392
        %v1089 = vunpack.c.l.b16 %v393
        %v1090 = vunpack.c.h.b16 %v393
        %v1091 = vunpack.c.l.b16 %v394
        %v1092 = vunpack.c.h.b16 %v394
        %v1093 = vunpack.c.l.b16 %v395
        %v1094 = vunpack.c.h.b16 %v395
        %v1095 = vunpack.c.l.b16 %v396
        %v1096 = vunpack.c.h.b16 %v396
        %v1097 = vunpack.c.l.b16 %v397
        %v1098 = vunpack.c.h.b16 %v397
        %v1099 = vunpack.c.l.b16 %v398
        %v1100 = vunpack.c.h.b16 %v398
        %v1101 = vunpack.c.l.b16 %v399
        %v1102 = vunpack.c.h.b16 %v399
        %v1103 = vunpack.c.l.b16 %v400
        %v1104 = vunpack.c.h.b16 %v400
        %v1105 = vunpack.c.l.b16 %v401
        %v1106 = vunpack.c.h.b16 %v401
        %v1107 = vunpack.c.l.b16 %v402
        %v1108 = vunpack.c.h.b16 %v402
        %v1109 = vunpack.c.l.b16 %v403
        %v1110 = vunpack.c.h.b16 %v403
        %v1111 = vunpack.c.l.b16 %v404
        %v1112 = vunpack.c.h.b16 %v404
        %v1113 = vunpack.c.l.b16 %v405
        %v1114 = vunpack.c.h.b16 %v405
        %v1115 = vunpack.c.l.b16 %v406
        %v1116 = vunpack.c.h.b16 %v406
        %v1117 = vunpack.c.l.b16 %v407
        %v1118 = vunpack.c.h.b16 %v407
        %v1119 = vunpack.c.l.b16 %v408
        %v1120 = vunpack.c.h.b16 %v408
        %v1121 = vunpack.c.l.b16 %v409
        %v1122 = vunpack.c.h.b16 %v409
        %v1123 = vunpack.c.l.b16 %v410
        %v1124 = vunpack.c.h.b16 %v410
        %v1125 = vunpack.c.l.b16 %v411
        %v1126 = vunpack.c.h.b16 %v411
        %v1127 = vunpack.c.l.b16 %v412
        %v1128 = vunpack.c.h.b16 %v412
        %v1129 = vunpack.c.l.b16 %v413
        %v1130 = vunpack.c.h.b16 %v413
        %v1131 = vunpack.c.l.b16 %v414
        %v1132 = vunpack.c.h.b16 %v414
        %v1133 = vunpack.c.l.b16 %v415
        %v1134 = vunpack.c.h.b16 %v415
        %v1135 = vunpack.c.l.b16 %v416
        %v1136 = vunpack.c.h.b16 %v416
        %v1137 = vunpack.c.l.b16 %v417
        %v1138 = vunpack.c.h.b16 %v417
        %v1139 = vunpack.c.l.b16 %v418
        %v1140 = vunpack.c.h.b16 %v418
        %v1141 = vunpack.c.l.b16 %v419
        %v1142 = vunpack.c.h.b16 %v419
        %v1143 = vunpack.c.l.b16 %v420
        %v1144 = vunpack.c.h.b16 %v420
        %v1145 = vunpack.c.l.b16 %v421
        %v1146 = vunpack.c.h.b16 %v421
        %v1147 = vunpack.c.l.b16 %v422
        %v1148 = vunpack.c.h.b16 %v422
        %v1149 = vunpack.c.l.b16 %v423
        %v1150 = vunpack.c.h.b16 %v423
        %v1151 = vunpack.c.l.b16 %v424
        %v1152 = vunpack.c.h.b16 %v424
        %v1153 = vunpack.c.l.b16 %v425
        %v1154 = vunpack.c.h.b16 %v425
        %v1155 = vunpack.c.l.b16 %v426
        %v1156 = vunpack.c.h.b16 %v426
        %v1157 = vunpack.c.l.b16 %v427
        %v1158 = vunpack.c.h.b16 %v427
        %v1159 = vunpack.c.l.b16 %v428
        %v1160 = vunpack.c.h.b16 %v428
        %v1161 = vunpack.c.l.b16 %v429
        %v1162 = vunpack.c.h.b16 %v429
        %v1163 = vunpack.c.l.b16 %v430
        %v1164 = vunpack.c.h.b16 %v430
        %v1165 = vunpack.c.l.b16 %v431
        %v1166 = vunpack.c.h.b16 %v431
        %v1167 = vunpack.c.l.b16 %v432
        %v1168 = vunpack.c.h.b16 %v432
        %v1169 = vunpack.c.l.b16 %v433
        %v1170 = vunpack.c.h.b16 %v433
        %v1171 = vunpack.c.l.b16 %v434
        %v1172 = vunpack.c.h.b16 %v434
        %v1173 = vunpack.c.l.b16 %v435
        %v1174 = vunpack.c.h.b16 %v435
        %v1175 = vunpack.c.l.b16 %v436
        %v1176 = vunpack.c.h.b16 %v436
        %v1177 = vunpack.c.l.b16 %v437
        %v1178 = vunpack.c.h.b16 %v437
        %v1179 = vunpack.c.l.b16 %v438
        %v1180 = vunpack.c.h.b16 %v438
        %v1181 = vunpack.c.l.b16 %v439
        %v1182 = vunpack.c.h.b16 %v439
        %v1183 = vunpack.c.l.b16 %v440
        %v1184 = vunpack.c.h.b16 %v440
        %v1185 = vunpack.c.l.b16 %v441
        %v1186 = vunpack.c.h.b16 %v441
        %v1187 = vunpack.c.l.b16 %v442
        %v1188 = vunpack.c.h.b16 %v442
        %v1189 = vunpack.c.l.b16 %v443
        %v1190 = vunpack.c.h.b16 %v443
        %v1191 = vunpack.c.l.b16 %v444
        %v1192 = vunpack.c.h.b16 %v444
        %v1193 = vunpack.c.l.b16 %v445
        %v1194 = vunpack.c.h.b16 %v445
        %v1195 = vunpack.c.l.b16 %v446
        %v1196 = vunpack.c.h.b16 %v446
        %v1197 = vunpack.c.l.b16 %v447
        %v1198 = vunpack.c.h.b16 %v447
        %v1199 = vunpack.c.l.b16 %v448
        %v1200 = vunpack.c.h.b16 %v448
        %v1201 = vunpack.c.l.b16 %v449
        %v1202 = vunpack.c.h.b16 %v449
        %v1203 = vunpack.c.l.b16 %v450
        %v1204 = vunpack.c.h.b16 %v450
        %v1205 = vunpack.c.l.b16 %v451
        %v1206 = vunpack.c.h.b16 %v451
        %v1207 = vunpack.c.l.b16 %v452
        %v1208 = vunpack.c.h.b16 %v452
        %v1209 = vunpack.c.l.b16 %v453
        %v1210 = vunpack.c.h.b16 %v453
        %v1211 = vunpack.c.l.b16 %v454
        %v1212 = vunpack.c.h.b16 %v454
        %v1213 = vunpack.c.l.b16 %v455
        %v1214 = vunpack.c.h.b16 %v455
        %v1215 = vunpack.c.l.b16 %v456
        %v1216 = vunpack.c.h.b16 %v456
        %v1217 = vunpack.c.l.b16 %v457
        %v1218 = vunpack.c.h.b16 %v457
        %v1219 = vunpack.c.l.b16 %v458
        %v1220 = vunpack.c.h.b16 %v458
        %v1221 = vunpack.c.l.b16 %v459
        %v1222 = vunpack.c.h.b16 %v459
        %v1223 = vunpack.c.l.b16 %v460
        %v1224 = vunpack.c.h.b16 %v460
        %v1225 = vunpack.c.l.b16 %v461
        %v1226 = vunpack.c.h.b16 %v461
        %v1227 = vunpack.c.l.b16 %v462
        %v1228 = vunpack.c.h.b16 %v462
        %v1229 = vunpack.c.l.b16 %v463
        %v1230 = vunpack.c.h.b16 %v463
        %v1231 = vunpack.c.l.b16 %v464
        %v1232 = vunpack.c.h.b16 %v464
        %v1233 = vunpack.c.l.b16 %v465
        %v1234 = vunpack.c.h.b16 %v465
        %v1235 = vunpack.c.l.b16 %v466
        %v1236 = vunpack.c.h.b16 %v466
        %v1237 = vunpack.c.l.b16 %v467
        %v1238 = vunpack.c.h.b16 %v467
        %v1239 = vunpack.c.l.b16 %v468
        %v1240 = vunpack.c.h.b16 %v468
        %v1241 = vunpack.c.l.b16 %v469
        %v1242 = vunpack.c.h.b16 %v469
        %v1243 = vunpack.c.l.b16 %v470
        %v1244 = vunpack.c.h.b16 %v470
        %v1245 = vunpack.c.l.b16 %v471
        %v1246 = vunpack.c.h.b16 %v471
        %v1247 = vunpack.c.l.b16 %v472
        %v1248 = vunpack.c.h.b16 %v472
        %v1249 = vunpack.c.l.b16 %v473
        %v1250 = vunpack.c.h.b16 %v473
        %v1251 = vunpack.c.l.b16 %v474
        %v1252 = vunpack.c.h.b16 %v474
        %v1253 = vunpack.c.l.b16 %v475
        %v1254 = vunpack.c.h.b16 %v475
        %v1255 = vunpack.c.l.b16 %v476
        %v1256 = vunpack.c.h.b16 %v476
        %v1257 = vunpack.c.l.b16 %v477
        %v1258 = vunpack.c.h.b16 %v477
        %v1259 = vunpack.c.l.b16 %v478
        %v1260 = vunpack.c.h.b16 %v478
        %v1261 = vunpack.c.l.b16 %v479
        %v1262 = vunpack.c.h.b16 %v479
        %v1263 = vunpack.c.l.b16 %v480
        %v1264 = vunpack.c.h.b16 %v480
        %v1265 = vunpack.c.l.b16 %v481
        %v1266 = vunpack.c.h.b16 %v481
        %v1267 = vunpack.c.l.b16 %v482
        %v1268 = vunpack.c.h.b16 %v482
        %v1269 = vunpack.c.l.b16 %v483
        %v1270 = vunpack.c.h.b16 %v483
        %v1271 = vunpack.c.l.b16 %v484
        %v1272 = vunpack.c.h.b16 %v484
        %v1273 = vunpack.c.l.b16 %v485
        %v1274 = vunpack.c.h.b16 %v485
        %v1275 = vunpack.c.l.b16 %v486
        %v1276 = vunpack.c.h.b16 %v486
        %v1277 = vunpack.c.l.b16 %v487
        %v1278 = vunpack.c.h.b16 %v487
        %v1279 = vunpack.c.l.b16 %v488
        %v1280 = vunpack.c.h.b16 %v488
        %v1281 = vunpack.c.l.b16 %v489
        %v1282 = vunpack.c.h.b16 %v489
        %v1283 = vunpack.c.l.b16 %v490
        %v1284 = vunpack.c.h.b16 %v490
        %v1285 = vunpack.c.l.b16 %v491
        %v1286 = vunpack.c.h.b16 %v491
        %v1287 = vunpack.c.l.b16 %v492
        %v1288 = vunpack.c.h.b16 %v492
        %v1289 = vunpack.c.l.b16 %v493
        %v1290 = vunpack.c.h.b16 %v493
        %v1291 = vunpack.c.l.b16 %v494
        %v1292 = vunpack.c.h.b16 %v494
        %v1293 = vunpack.c.l.b16 %v495
        %v1294 = vunpack.c.h.b16 %v495
        %v1295 = vunpack.c.l.b16 %v496
        %v1296 = vunpack.c.h.b16 %v496
        %v1297 = vunpack.c.l.b16 %v497
        %v1298 = vunpack.c.h.b16 %v497
        %v1299 = vunpack.c.l.b16 %v498
        %v1300 = vunpack.c.h.b16 %v498
        %v1301 = vunpack.c.l.b16 %v499
        %v1302 = vunpack.c.h.b16 %v499
        %v1303 = vunpack.c.l.b16 %v500
        %v1304 = vunpack.c.h.b16 %v500
        %v1305 = vunpack.c.l.b16 %v501
        %v1306 = vunpack.c.h.b16 %v501
        %v1307 = vunpack.c.l.b16 %v502
        %v1308 = vunpack.c.h.b16 %v502
        %v1309 = vunpack.c.l.b16 %v503
        %v1310 = vunpack.c.h.b16 %v503
        %v1311 = vunpack.c.l.b16 %v504
        %v1312 = vunpack.c.h.b16 %v504
        %v1313 = vunpack.c.l.b16 %v505
        %v1314 = vunpack.c.h.b16 %v505
        %v1315 = vunpack.c.l.b16 %v506
        %v1316 = vunpack.c.h.b16 %v506
        %v1317 = vunpack.c.l.b16 %v507
        %v1318 = vunpack.c.h.b16 %v507
        %v1319 = vunpack.c.l.b16 %v508
        %v1320 = vunpack.c.h.b16 %v508
        %v1321 = vunpack.c.l.b16 %v509
        %v1322 = vunpack.c.h.b16 %v509
        %v1323 = vunpack.c.l.b16 %v510
        %v1324 = vunpack.c.h.b16 %v510
        %v1325 = vunpack.c.l.b16 %v511
        %v1326 = vunpack.c.h.b16 %v511
        %v1327 = vunpack.c.l.b16 %v512
        %v1328 = vunpack.c.h.b16 %v512
        %v1329 = vunpack.c.l.b16 %v513
        %v1330 = vunpack.c.h.b16 %v513
        %v1331 = vunpack.c.l.b16 %v514
        %v1332 = vunpack.c.h.b16 %v514
        %v1333 = vunpack.c.l.b16 %v515
        %v1334 = vunpack.c.h.b16 %v515
        %v1335 = vunpack.c.l.b16 %v516
        %v1336 = vunpack.c.h.b16 %v516
        %v1337 = vunpack.c.l.b16 %v517
        %v1338 = vunpack.c.h.b16 %v517
        %v1339 = vunpack.c.l.b16 %v518
        %v1340 = vunpack.c.h.b16 %v518
        %v1341 = vunpack.c.l.b16 %v519
        %v1342 = vunpack.c.h.b16 %v519
        %v1343 = vunpack.c.l.b16 %v520
        %v1344 = vunpack.c.h.b16 %v520
        %v1345 = vunpack.c.l.b16 %v521
        %v1346 = vunpack.c.h.b16 %v521
        %v1347 = vunpack.c.l.b16 %v522
        %v1348 = vunpack.c.h.b16 %v522
        %v1349 = vunpack.c.l.b16 %v523
        %v1350 = vunpack.c.h.b16 %v523
        %v1351 = vunpack.c.l.b16 %v524
        %v1352 = vunpack.c.h.b16 %v524
        %v1353 = vunpack.c.l.b16 %v525
        %v1354 = vunpack.c.h.b16 %v525
        %v1355 = vunpack.c.l.b16 %v526
        %v1356 = vunpack.c.h.b16 %v526
        %v1357 = vpack.c.b16 %v853, %v845
        %v1358 = vpack.c.b16 %v854, %v846
        %v1359 = vpack.c.b16 %v855, %v847
        %v1360 = vpack.c.b16 %v856, %v848
        %v1361 = vpack.c.b16 %v857, %v849
        %v1362 = vpack.c.b16 %v858, %v850
        %v1363 = vpack.c.b16 %v859, %v851
        %v1364 = vpack.c.b16 %v860, %v852
        %v1365 = vpack.c.b16 %v869, %v861
        %v1366 = vpack.c.b16 %v870, %v862
        %v1367 = vpack.c.b16 %v871, %v863
        %v1368 = vpack.c.b16 %v872, %v864
        %v1369 = vpack.c.b16 %v873, %v865
        %v1370 = vpack.c.b16 %v874, %v866
        %v1371 = vpack.c.b16 %v875, %v867
        %v1372 = vpack.c.b16 %v876, %v868
        %v1373 = vpack.c.b16 %v885, %v877
        %v1374 = vpack.c.b16 %v886, %v878
        %v1375 = vpack.c.b16 %v887, %v879
        %v1376 = vpack.c.b16 %v888, %v880
        %v1377 = vpack.c.b16 %v889, %v881
        %v1378 = vpack.c.b16 %v890, %v882
        %v1379 = vpack.c.b16 %v891, %v883
        %v1380 = vpack.c.b16 %v892, %v884
        %v1381 = vpack.c.b16 %v901, %v893
        %v1382 = vpack.c.b16 %v902, %v894
        %v1383 = vpack.c.b16 %v903, %v895
        %v1384 = vpack.c.b16 %v904, %v896
        %v1385 = vpack.c.b16 %v905, %v897
        %v1386 = vpack.c.b16 %v906, %v898
        %v1387 = vpack.c.b16 %v907, %v899
        %v1388 = vpack.c.b16 %v908, %v900
        %v1389 = vpack.c.b16 %v917, %v909
        %v1390 = vpack.c.b16 %v918, %v910
        %v1391 = vpack.c.b16 %v919, %v911
        %v1392 = vpack.c.b16 %v920, %v912
        %v1393 = vpack.c.b16 %v921, %v913
        %v1394 = vpack.c.b16 %v922, %v914
        %v1395 = vpack.c.b16 %v923, %v915
        %v1396 = vpack.c.b16 %v924, %v916
        %v1397 = vpack.c.b16 %v933, %v925
        %v1398 = vpack.c.b16 %v934, %v926
        %v1399 = vpack.c.b16 %v935, %v927
        %v1400 = vpack.c.b16 %v936, %v928
        %v1401 = vpack.c.b16 %v937, %v929
        %v1402 = vpack.c.b16 %v938, %v930
        %v1403 = vpack.c.b16 %v939, %v931
        %v1404 = vpack.c.b16 %v940, %v932
        %v1405 = vpack.c.b16 %v949, %v941
        %v1406 = vpack.c.b16 %v950, %v942
        %v1407 = vpack.c.b16 %v951, %v943
        %v1408 = vpack.c.b16 %v952, %v944
        %v1409 = vpack.c.b16 %v953, %v945
        %v1410 = vpack.c.b16 %v954, %v946
        %v1411 = vpack.c.b16 %v955, %v947
        %v1412 = vpack.c.b16 %v956, %v948
        %v1413 = vpack.c.b16 %v965, %v957
        %v1414 = vpack.c.b16 %v966, %v958
        %v1415 = vpack.c.b16 %v967, %v959
        %v1416 = vpack.c.b16 %v968, %v960
        %v1417 = vpack.c.b16 %v969, %v961
        %v1418 = vpack.c.b16 %v970, %v962
        %v1419 = vpack.c.b16 %v971, %v963
        %v1420 = vpack.c.b16 %v972, %v964
        %v1421 = vpack.c.b16 %v981, %v973
        %v1422 = vpack.c.b16 %v982, %v974
        %v1423 = vpack.c.b16 %v983, %v975
        %v1424 = vpack.c.b16 %v984, %v976
        %v1425 = vpack.c.b16 %v985, %v977
        %v1426 = vpack.c.b16 %v986, %v978
        %v1427 = vpack.c.b16 %v987, %v979
        %v1428 = vpack.c.b16 %v988, %v980
        %v1429 = vpack.c.b16 %v997, %v989
        %v1430 = vpack.c.b16 %v998, %v990
        %v1431 = vpack.c.b16 %v999, %v991
        %v1432 = vpack.c.b16 %v1000, %v992
        %v1433 = vpack.c.b16 %v1001, %v993
        %v1434 = vpack.c.b16 %v1002, %v994
        %v1435 = vpack.c.b16 %v1003, %v995
        %v1436 = vpack.c.b16 %v1004, %v996
        %v1437 = vpack.c.b16 %v1013, %v1005
        %v1438 = vpack.c.b16 %v1014, %v1006
        %v1439 = vpack.c.b16 %v1015, %v1007
        %v1440 = vpack.c.b16 %v1016, %v1008
        %v1441 = vpack.c.b16 %v1017, %v1009
        %v1442 = vpack.c.b16 %v1018, %v1010
        %v1443 = vpack.c.b16 %v1019, %v1011
        %v1444 = vpack.c.b16 %v1020, %v1012
        %v1445 = vpack.c.b16 %v1029, %v1021
        %v1446 = vpack.c.b16 %v1030, %v1022
        %v1447 = vpack.c.b16 %v1031, %v1023
        %v1448 = vpack.c.b16 %v1032, %v1024
        %v1449 = vpack.c.b16 %v1033, %v1025
        %v1450 = vpack.c.b16 %v1034, %v1026
        %v1451 = vpack.c.b16 %v1035, %v1027
        %v1452 = vpack.c.b16 %v1036, %v1028
        %v1453 = vpack.c.b16 %v1045, %v1037
        %v1454 = vpack.c.b16 %v1046, %v1038
        %v1455 = vpack.c.b16 %v1047, %v1039
        %v1456 = vpack.c.b16 %v1048, %v1040
        %v1457 = vpack.c.b16 %v1049, %v1041
        %v1458 = vpack.c.b16 %v1050, %v1042
        %v1459 = vpack.c.b16 %v1051, %v1043
        %v1460 = vpack.c.b16 %v1052, %v1044
        %v1461 = vpack.c.b16 %v1061, %v1053
        %v1462 = vpack.c.b16 %v1062, %v1054
        %v1463 = vpack.c.b16 %v1063, %v1055
        %v1464 = vpack.c.b16 %v1064, %v1056
        %v1465 = vpack.c.b16 %v1065, %v1057
        %v1466 = vpack.c.b16 %v1066, %v1058
        %v1467 = vpack.c.b16 %v1067, %v1059
        %v1468 = vpack.c.b16 %v1068, %v1060
        %v1469 = vpack.c.b16 %v1077, %v1069
        %v1470 = vpack.c.b16 %v1078, %v1070
        %v1471 = vpack.c.b16 %v1079, %v1071
        %v1472 = vpack.c.b16 %v1080, %v1072
        %v1473 = vpack.c.b16 %v1081, %v1073
        %v1474 = vpack.c.b16 %v1082, %v1074
        %v1475 = vpack.c.b16 %v1083, %v1075
        %v1476 = vpack.c.b16 %v1084, %v1076
        %v1477 = vpack.c.b16 %v1093, %v1085
        %v1478 = vpack.c.b16 %v1094, %v1086
        %v1479 = vpack.c.b16 %v1095, %v1087
        %v1480 = vpack.c.b16 %v1096, %v1088
        %v1481 = vpack.c.b16 %v1097, %v1089
        %v1482 = vpack.c.b16 %v1098, %v1090
        %v1483 = vpack.c.b16 %v1099, %v1091
        %v1484 = vpack.c.b16 %v1100, %v1092
        %v1485 = vpack.c.b16 %v1109, %v1101
        %v1486 = vpack.c.b16 %v1110, %v1102
        %v1487 = vpack.c.b16 %v1111, %v1103
        %v1488 = vpack.c.b16 %v1112, %v1104
        %v1489 = vpack.c.b16 %v1113, %v1105
        %v1490 = vpack.c.b16 %v1114, %v1106
        %v1491 = vpack.c.b16 %v1115, %v1107
        %v1492 = vpack.c.b16 %v1116, %v1108
        %v1493 = vpack.c.b16 %v1125, %v1117
        %v1494 = vpack.c.b16 %v1126, %v1118
        %v1495 = vpack.c.b16 %v1127, %v1119
        %v1496 = vpack.c.b16 %v1128, %v1120
        %v1497 = vpack.c.b16 %v1129, %v1121
        %v1498 = vpack.c.b16 %v1130, %v1122
        %v1499 = vpack.c.b16 %v1131, %v1123
        %v1500 = vpack.c.b16 %v1132, %v1124
        %v1501 = vpack.c.b16 %v1141, %v1133
        %v1502 = vpack.c.b16 %v1142, %v1134
        %v1503 = vpack.c.b16 %v1143, %v1135
        %v1504 = vpack.c.b16 %v1144, %v1136
        %v1505 = vpack.c.b16 %v1145, %v1137
        %v1506 = vpack.c.b16 %v1146, %v1138
        %v1507 = vpack.c.b16 %v1147, %v1139
        %v1508 = vpack.c.b16 %v1148, %v1140
        %v1509 = vpack.c.b16 %v1157, %v1149
        %v1510 = vpack.c.b16 %v1158, %v1150
        %v1511 = vpack.c.b16 %v1159, %v1151
        %v1512 = vpack.c.b16 %v1160, %v1152
        %v1513 = vpack.c.b16 %v1161, %v1153
        %v1514 = vpack.c.b16 %v1162, %v1154
        %v1515 = vpack.c.b16 %v1163, %v1155
        %v1516 = vpack.c.b16 %v1164, %v1156
        %v1517 = vpack.c.b16 %v1173, %v1165
        %v1518 = vpack.c.b16 %v1174, %v1166
        %v1519 = vpack.c.b16 %v1175, %v1167
        %v1520 = vpack.c.b16 %v1176, %v1168
        %v1521 = vpack.c.b16 %v1177, %v1169
        %v1522 = vpack.c.b16 %v1178, %v1170
        %v1523 = vpack.c.b16 %v1179, %v1171
        %v1524 = vpack.c.b16 %v1180, %v1172
        %v1525 = vpack.c.b16 %v1189, %v1181
        %v1526 = vpack.c.b16 %v1190, %v1182
        %v1527 = vpack.c.b16 %v1191, %v1183
        %v1528 = vpack.c.b16 %v1192, %v1184
        %v1529 = vpack.c.b16 %v1193, %v1185
        %v1530 = vpack.c.b16 %v1194, %v1186
        %v1531 = vpack.c.b16 %v1195, %v1187
        %v1532 = vpack.c.b16 %v1196, %v1188
        %v1533 = vpack.c.b16 %v1205, %v1197
        %v1534 = vpack.c.b16 %v1206, %v1198
        %v1535 = vpack.c.b16 %v1207, %v1199
        %v1536 = vpack.c.b16 %v1208, %v1200
        %v1537 = vpack.c.b16 %v1209, %v1201
        %v1538 = vpack.c.b16 %v1210, %v1202
        %v1539 = vpack.c.b16 %v1211, %v1203
        %v1540 = vpack.c.b16 %v1212, %v1204
        %v1541 = vpack.c.b16 %v1221, %v1213
        %v1542 = vpack.c.b16 %v1222, %v1214
        %v1543 = vpack.c.b16 %v1223, %v1215
        %v1544 = vpack.c.b16 %v1224, %v1216
        %v1545 = vpack.c.b16 %v1225, %v1217
        %v1546 = vpack.c.b16 %v1226, %v1218
        %v1547 = vpack.c.b16 %v1227, %v1219
        %v1548 = vpack.c.b16 %v1228, %v1220
        %v1549 = vpack.c.b16 %v1237, %v1229
        %v1550 = vpack.c.b16 %v1238, %v1230
        %v1551 = vpack.c.b16 %v1239, %v1231
        %v1552 = vpack.c.b16 %v1240, %v1232
        %v1553 = vpack.c.b16 %v1241, %v1233
        %v1554 = vpack.c.b16 %v1242, %v1234
        %v1555 = vpack.c.b16 %v1243, %v1235
        %v1556 = vpack.c.b16 %v1244, %v1236
        %v1557 = vpack.c.b16 %v1253, %v1245
        %v1558 = vpack.c.b16 %v1254, %v1246
        %v1559 = vpack.c.b16 %v1255, %v1247
        %v1560 = vpack.c.b16 %v1256, %v1248
        %v1561 = vpack.c.b16 %v1257, %v1249
        %v1562 = vpack.c.b16 %v1258, %v1250
        %v1563 = vpack.c.b16 %v1259, %v1251
        %v1564 = vpack.c.b16 %v1260, %v1252
        %v1565 = vpack.c.b16 %v1269, %v1261
        %v1566 = vpack.c.b16 %v1270, %v1262
        %v1567 = vpack.c.b16 %v1271, %v1263
        %v1568 = vpack.c.b16 %v1272, %v1264
        %v1569 = vpack.c.b16 %v1273, %v1265
        %v1570 = vpack.c.b16 %v1274, %v1266
        %v1571 = vpack.c.b16 %v1275, %v1267
        %v1572 = vpack.c.b16 %v1276, %v1268
        %v1573 = vpack.c.b16 %v1285, %v1277
        %v1574 = vpack.c.b16 %v1286, %v1278
        %v1575 = vpack.c.b16 %v1287, %v1279
        %v1576 = vpack.c.b16 %v1288, %v1280
        %v1577 = vpack.c.b16 %v1289, %v1281
        %v1578 = vpack.c.b16 %v1290, %v1282
        %v1579 = vpack.c.b16 %v1291, %v1283
        %v1580 = vpack.c.b16 %v1292, %v1284
        %v1581 = vpack.c.b16 %v1301, %v1293
        %v1582 = vpack.c.b16 %v1302, %v1294
        %v1583 = vpack.c.b16 %v1303, %v1295
        %v1584 = vpack.c.b16 %v1304, %v1296
        %v1585 = vpack.c.b16 %v1305, %v1297
        %v1586 = vpack.c.b16 %v1306, %v1298
        %v1587 = vpack.c.b16 %v1307, %v1299
        %v1588 = vpack.c.b16 %v1308, %v1300
        %v1589 = vpack.c.b16 %v1317, %v1309
        %v1590 = vpack.c.b16 %v1318, %v1310
        %v1591 = vpack.c.b16 %v1319, %v1311
        %v1592 = vpack.c.b16 %v1320, %v1312
        %v1593 = vpack.c.b16 %v1321, %v1313
        %v1594 = vpack.c.b16 %v1322, %v1314
        %v1595 = vpack.c.b16 %v1323, %v1315
        %v1596 = vpack.c.b16 %v1324, %v1316
        %v1597 = vpack.c.b16 %v1333, %v1325
        %v1598 = vpack.c.b16 %v1334, %v1326
        %v1599 = vpack.c.b16 %v1335, %v1327
        %v1600 = vpack.c.b16 %v1336, %v1328
        %v1601 = vpack.c.b16 %v1337, %v1329
        %v1602 = vpack.c.b16 %v1338, %v1330
        %v1603 = vpack.c.b16 %v1339, %v1331
        %v1604 = vpack.c.b16 %v1340, %v1332
        %v1605 = vpack.c.b16 %v1349, %v1341
        %v1606 = vpack.c.b16 %v1350, %v1342
        %v1607 = vpack.c.b16 %v1351, %v1343
        %v1608 = vpack.c.b16 %v1352, %v1344
        %v1609 = vpack.c.b16 %v1353, %v1345
        %v1610 = vpack.c.b16 %v1354, %v1346
        %v1611 = vpack.c.b16 %v1355, %v1347
        %v1612 = vpack.c.b16 %v1356, %v1348
        %1869 = vmatprep.subr.bf16.mxu0 %v1414
        %1870 = vmatpush1.bf16.msra.mxu0 %v1413
        %1871 = vmatprep.subr.bf16.mxu0 %v1406
        %1872 = vmatpush1.bf16.msra.mxu0 %v1405
        %1873 = vmatprep.subr.bf16.mxu0 %v1398
        %1874 = vmatpush1.bf16.msra.mxu0 %v1397
        %1875 = vmatprep.subr.bf16.mxu0 %v1390
        %1876 = vmatpush1.bf16.msra.mxu0 %v1389
        %1877 = vmatprep.subr.bf16.mxu0 %v1382
        %1878 = vmatpush1.bf16.msra.mxu0 %v1381
        %1879 = vmatprep.subr.bf16.mxu0 %v1374
        %1880 = vmatpush1.bf16.msra.mxu0 %v1373
        %1881 = vmatprep.subr.bf16.mxu0 %v1366
        %1882 = vmatpush1.bf16.msra.mxu0 %v1365
        %1883 = vmatprep.subr.bf16.mxu0 %v1358
        %1884 = vmatpush1.bf16.msra.mxu0 %v1357
        %1885 = vmatprep.subr.bf16.mxu0 %v1478
        %1886 = vmatpush2.bf16.msra.mxu0 %v1477
        %1887 = vmatprep.subr.bf16.mxu0 %v1470
        %1888 = vmatpush2.bf16.msra.mxu0 %v1469
        %1889 = vmatprep.subr.bf16.mxu0 %v1462
        %1890 = vmatpush2.bf16.msra.mxu0 %v1461
        %1891 = vmatprep.subr.bf16.mxu0 %v1454
        %1892 = vmatpush2.bf16.msra.mxu0 %v1453
        %1893 = vmatprep.subr.bf16.mxu0 %v1446
        %1894 = vmatpush2.bf16.msra.mxu0 %v1445
        %1895 = vmatprep.subr.bf16.mxu0 %v1438
        %1896 = vmatpush2.bf16.msra.mxu0 %v1437
        %1897 = vmatprep.subr.bf16.mxu0 %v1430
        %1898 = vmatpush2.bf16.msra.mxu0 %v1429
        %1899 = vmatprep.subr.bf16.mxu0 %v1422
        %1900 = vmatpush2.bf16.msra.mxu0 %v1421
        %1901 = vmatprep.mubr.bf16.mxu0 %v582
        %1902 = vmatmul.mubr.bf16.gmra.mxu0 %v581
        %v1903 = vpop.f32.mrf.mxu0
        %v1904 = vadd.f32 %v532, %v1903
        %v1905 = vpop.f32.mrf.mxu0
        %v1906 = vadd.f32 %v536, %v1905
        %v1907 = vpop.f32.mrf.mxu0
        %v1908 = vadd.f32 %v532, %v1907
        %v1909 = vpop.f32.mrf.mxu0
        %v1910 = vadd.f32 %v536, %v1909
        %1911 = vdwg.mxu0
        %1912 = vmatprep.subr.bf16.mxu0 %v1542
        %1913 = vmatpush1.bf16.msra.mxu0 %v1541
        %1914 = vmatprep.subr.bf16.mxu0 %v1534
        %1915 = vmatpush1.bf16.msra.mxu0 %v1533
        %1916 = vmatprep.subr.bf16.mxu0 %v1526
        %1917 = vmatpush1.bf16.msra.mxu0 %v1525
        %1918 = vmatprep.subr.bf16.mxu0 %v1518
        %1919 = vmatpush1.bf16.msra.mxu0 %v1517
        %1920 = vmatprep.subr.bf16.mxu0 %v1510
        %1921 = vmatpush1.bf16.msra.mxu0 %v1509
        %1922 = vmatprep.subr.bf16.mxu0 %v1502
        %1923 = vmatpush1.bf16.msra.mxu0 %v1501
        %1924 = vmatprep.subr.bf16.mxu0 %v1494
        %1925 = vmatpush1.bf16.msra.mxu0 %v1493
        %1926 = vmatprep.subr.bf16.mxu0 %v1486
        %1927 = vmatpush1.bf16.msra.mxu0 %v1485
        %1928 = vmatprep.subr.bf16.mxu0 %v1606
        %1929 = vmatpush2.bf16.msra.mxu0 %v1605
        %1930 = vmatprep.subr.bf16.mxu0 %v1598
        %1931 = vmatpush2.bf16.msra.mxu0 %v1597
        %1932 = vmatprep.subr.bf16.mxu0 %v1590
        %1933 = vmatpush2.bf16.msra.mxu0 %v1589
        %1934 = vmatprep.subr.bf16.mxu0 %v1582
        %1935 = vmatpush2.bf16.msra.mxu0 %v1581
        %1936 = vmatprep.subr.bf16.mxu0 %v1574
        %1937 = vmatpush2.bf16.msra.mxu0 %v1573
        %1938 = vmatprep.subr.bf16.mxu0 %v1566
        %1939 = vmatpush2.bf16.msra.mxu0 %v1565
        %1940 = vmatprep.subr.bf16.mxu0 %v1558
        %1941 = vmatpush2.bf16.msra.mxu0 %v1557
        %1942 = vmatprep.subr.bf16.mxu0 %v1550
        %1943 = vmatpush2.bf16.msra.mxu0 %v1549
        %1944 = vmatprep.mubr.bf16.mxu0 %v584
        %1945 = vmatmul.mubr.bf16.gmra.mxu0 %v583
        %v1946 = vpop.f32.mrf.mxu0
        %v1947 = vadd.f32 %v1904, %v1946
        %v1948 = vpop.f32.mrf.mxu0
        %v1949 = vadd.f32 %v1906, %v1948
        %v1950 = vpop.f32.mrf.mxu0
        %v1951 = vadd.f32 %v1908, %v1950
        %v1952 = vpop.f32.mrf.mxu0
        %v1953 = vadd.f32 %v1910, %v1952
        %1954 = vdwg.mxu0
        %1955 = vmatprep.subr.bf16.mxu0 %v1416
        %1956 = vmatpush1.bf16.msra.mxu0 %v1415
        %1957 = vmatprep.subr.bf16.mxu0 %v1408
        %1958 = vmatpush1.bf16.msra.mxu0 %v1407
        %1959 = vmatprep.subr.bf16.mxu0 %v1400
        %1960 = vmatpush1.bf16.msra.mxu0 %v1399
        %1961 = vmatprep.subr.bf16.mxu0 %v1392
        %1962 = vmatpush1.bf16.msra.mxu0 %v1391
        %1963 = vmatprep.subr.bf16.mxu0 %v1384
        %1964 = vmatpush1.bf16.msra.mxu0 %v1383
        %1965 = vmatprep.subr.bf16.mxu0 %v1376
        %1966 = vmatpush1.bf16.msra.mxu0 %v1375
        %1967 = vmatprep.subr.bf16.mxu0 %v1368
        %1968 = vmatpush1.bf16.msra.mxu0 %v1367
        %1969 = vmatprep.subr.bf16.mxu0 %v1360
        %1970 = vmatpush1.bf16.msra.mxu0 %v1359
        %1971 = vmatprep.subr.bf16.mxu0 %v1480
        %1972 = vmatpush2.bf16.msra.mxu0 %v1479
        %1973 = vmatprep.subr.bf16.mxu0 %v1472
        %1974 = vmatpush2.bf16.msra.mxu0 %v1471
        %1975 = vmatprep.subr.bf16.mxu0 %v1464
        %1976 = vmatpush2.bf16.msra.mxu0 %v1463
        %1977 = vmatprep.subr.bf16.mxu0 %v1456
        %1978 = vmatpush2.bf16.msra.mxu0 %v1455
        %1979 = vmatprep.subr.bf16.mxu0 %v1448
        %1980 = vmatpush2.bf16.msra.mxu0 %v1447
        %1981 = vmatprep.subr.bf16.mxu0 %v1440
        %1982 = vmatpush2.bf16.msra.mxu0 %v1439
        %1983 = vmatprep.subr.bf16.mxu0 %v1432
        %1984 = vmatpush2.bf16.msra.mxu0 %v1431
        %1985 = vmatprep.subr.bf16.mxu0 %v1424
        %1986 = vmatpush2.bf16.msra.mxu0 %v1423
        %1987 = vmatprep.mubr.bf16.mxu0 %v582
        %1988 = vmatmul.mubr.bf16.gmra.mxu0 %v581
        %v1989 = vpop.f32.mrf.mxu0
        %v1990 = vadd.f32 %v540, %v1989
        %v1991 = vpop.f32.mrf.mxu0
        %v1992 = vadd.f32 %v544, %v1991
        %v1993 = vpop.f32.mrf.mxu0
        %v1994 = vadd.f32 %v540, %v1993
        %v1995 = vpop.f32.mrf.mxu0
        %v1996 = vadd.f32 %v544, %v1995
        %1997 = vdwg.mxu0
        %1998 = vmatprep.subr.bf16.mxu0 %v1544
        %1999 = vmatpush1.bf16.msra.mxu0 %v1543
        %2000 = vmatprep.subr.bf16.mxu0 %v1536
        %2001 = vmatpush1.bf16.msra.mxu0 %v1535
        %2002 = vmatprep.subr.bf16.mxu0 %v1528
        %2003 = vmatpush1.bf16.msra.mxu0 %v1527
        %2004 = vmatprep.subr.bf16.mxu0 %v1520
        %2005 = vmatpush1.bf16.msra.mxu0 %v1519
        %2006 = vmatprep.subr.bf16.mxu0 %v1512
        %2007 = vmatpush1.bf16.msra.mxu0 %v1511
        %2008 = vmatprep.subr.bf16.mxu0 %v1504
        %2009 = vmatpush1.bf16.msra.mxu0 %v1503
        %2010 = vmatprep.subr.bf16.mxu0 %v1496
        %2011 = vmatpush1.bf16.msra.mxu0 %v1495
        %2012 = vmatprep.subr.bf16.mxu0 %v1488
        %2013 = vmatpush1.bf16.msra.mxu0 %v1487
        %2014 = vmatprep.subr.bf16.mxu0 %v1608
        %2015 = vmatpush2.bf16.msra.mxu0 %v1607
        %2016 = vmatprep.subr.bf16.mxu0 %v1600
        %2017 = vmatpush2.bf16.msra.mxu0 %v1599
        %2018 = vmatprep.subr.bf16.mxu0 %v1592
        %2019 = vmatpush2.bf16.msra.mxu0 %v1591
        %2020 = vmatprep.subr.bf16.mxu0 %v1584
        %2021 = vmatpush2.bf16.msra.mxu0 %v1583
        %2022 = vmatprep.subr.bf16.mxu0 %v1576
        %2023 = vmatpush2.bf16.msra.mxu0 %v1575
        %2024 = vmatprep.subr.bf16.mxu0 %v1568
        %2025 = vmatpush2.bf16.msra.mxu0 %v1567
        %2026 = vmatprep.subr.bf16.mxu0 %v1560
        %2027 = vmatpush2.bf16.msra.mxu0 %v1559
        %2028 = vmatprep.subr.bf16.mxu0 %v1552
        %2029 = vmatpush2.bf16.msra.mxu0 %v1551
        %2030 = vmatprep.mubr.bf16.mxu0 %v584
        %2031 = vmatmul.mubr.bf16.gmra.mxu0 %v583
        %v2032 = vpop.f32.mrf.mxu0
        %v2033 = vadd.f32 %v1990, %v2032
        %v2034 = vpop.f32.mrf.mxu0
        %v2035 = vadd.f32 %v1992, %v2034
        %v2036 = vpop.f32.mrf.mxu0
        %v2037 = vadd.f32 %v1994, %v2036
        %v2038 = vpop.f32.mrf.mxu0
        %v2039 = vadd.f32 %v1996, %v2038
        %2040 = vdwg.mxu0
        %2041 = vmatprep.subr.bf16.mxu0 %v1418
        %2042 = vmatpush1.bf16.msra.mxu0 %v1417
        %2043 = vmatprep.subr.bf16.mxu0 %v1410
        %2044 = vmatpush1.bf16.msra.mxu0 %v1409
        %2045 = vmatprep.subr.bf16.mxu0 %v1402
        %2046 = vmatpush1.bf16.msra.mxu0 %v1401
        %2047 = vmatprep.subr.bf16.mxu0 %v1394
        %2048 = vmatpush1.bf16.msra.mxu0 %v1393
        %2049 = vmatprep.subr.bf16.mxu0 %v1386
        %2050 = vmatpush1.bf16.msra.mxu0 %v1385
        %2051 = vmatprep.subr.bf16.mxu0 %v1378
        %2052 = vmatpush1.bf16.msra.mxu0 %v1377
        %2053 = vmatprep.subr.bf16.mxu0 %v1370
        %2054 = vmatpush1.bf16.msra.mxu0 %v1369
        %2055 = vmatprep.subr.bf16.mxu0 %v1362
        %2056 = vmatpush1.bf16.msra.mxu0 %v1361
        %2057 = vmatprep.subr.bf16.mxu0 %v1482
        %2058 = vmatpush2.bf16.msra.mxu0 %v1481
        %2059 = vmatprep.subr.bf16.mxu0 %v1474
        %2060 = vmatpush2.bf16.msra.mxu0 %v1473
        %2061 = vmatprep.subr.bf16.mxu0 %v1466
        %2062 = vmatpush2.bf16.msra.mxu0 %v1465
        %2063 = vmatprep.subr.bf16.mxu0 %v1458
        %2064 = vmatpush2.bf16.msra.mxu0 %v1457
        %2065 = vmatprep.subr.bf16.mxu0 %v1450
        %2066 = vmatpush2.bf16.msra.mxu0 %v1449
        %2067 = vmatprep.subr.bf16.mxu0 %v1442
        %2068 = vmatpush2.bf16.msra.mxu0 %v1441
        %2069 = vmatprep.subr.bf16.mxu0 %v1434
        %2070 = vmatpush2.bf16.msra.mxu0 %v1433
        %2071 = vmatprep.subr.bf16.mxu0 %v1426
        %2072 = vmatpush2.bf16.msra.mxu0 %v1425
        %2073 = vmatprep.mubr.bf16.mxu0 %v582
        %2074 = vmatmul.mubr.bf16.gmra.mxu0 %v581
        %v2075 = vpop.f32.mrf.mxu0
        %v2076 = vadd.f32 %v548, %v2075
        %v2077 = vpop.f32.mrf.mxu0
        %v2078 = vadd.f32 %v552, %v2077
        %v2079 = vpop.f32.mrf.mxu0
        %v2080 = vadd.f32 %v548, %v2079
        %v2081 = vpop.f32.mrf.mxu0
        %v2082 = vadd.f32 %v552, %v2081
        %2083 = vdwg.mxu0
        %2084 = vmatprep.subr.bf16.mxu0 %v1546
        %2085 = vmatpush1.bf16.msra.mxu0 %v1545
        %2086 = vmatprep.subr.bf16.mxu0 %v1538
        %2087 = vmatpush1.bf16.msra.mxu0 %v1537
        %2088 = vmatprep.subr.bf16.mxu0 %v1530
        %2089 = vmatpush1.bf16.msra.mxu0 %v1529
        %2090 = vmatprep.subr.bf16.mxu0 %v1522
        %2091 = vmatpush1.bf16.msra.mxu0 %v1521
        %2092 = vmatprep.subr.bf16.mxu0 %v1514
        %2093 = vmatpush1.bf16.msra.mxu0 %v1513
        %2094 = vmatprep.subr.bf16.mxu0 %v1506
        %2095 = vmatpush1.bf16.msra.mxu0 %v1505
        %2096 = vmatprep.subr.bf16.mxu0 %v1498
        %2097 = vmatpush1.bf16.msra.mxu0 %v1497
        %2098 = vmatprep.subr.bf16.mxu0 %v1490
        %2099 = vmatpush1.bf16.msra.mxu0 %v1489
        %2100 = vmatprep.subr.bf16.mxu0 %v1610
        %2101 = vmatpush2.bf16.msra.mxu0 %v1609
        %2102 = vmatprep.subr.bf16.mxu0 %v1602
        %2103 = vmatpush2.bf16.msra.mxu0 %v1601
        %2104 = vmatprep.subr.bf16.mxu0 %v1594
        %2105 = vmatpush2.bf16.msra.mxu0 %v1593
        %2106 = vmatprep.subr.bf16.mxu0 %v1586
        %2107 = vmatpush2.bf16.msra.mxu0 %v1585
        %2108 = vmatprep.subr.bf16.mxu0 %v1578
        %2109 = vmatpush2.bf16.msra.mxu0 %v1577
        %2110 = vmatprep.subr.bf16.mxu0 %v1570
        %2111 = vmatpush2.bf16.msra.mxu0 %v1569
        %2112 = vmatprep.subr.bf16.mxu0 %v1562
        %2113 = vmatpush2.bf16.msra.mxu0 %v1561
        %2114 = vmatprep.subr.bf16.mxu0 %v1554
        %2115 = vmatpush2.bf16.msra.mxu0 %v1553
        %2116 = vmatprep.mubr.bf16.mxu0 %v584
        %2117 = vmatmul.mubr.bf16.gmra.mxu0 %v583
        %v2118 = vpop.f32.mrf.mxu0
        %v2119 = vadd.f32 %v2076, %v2118
        %v2120 = vpop.f32.mrf.mxu0
        %v2121 = vadd.f32 %v2078, %v2120
        %v2122 = vpop.f32.mrf.mxu0
        %v2123 = vadd.f32 %v2080, %v2122
        %v2124 = vpop.f32.mrf.mxu0
        %v2125 = vadd.f32 %v2082, %v2124
        %2126 = vdwg.mxu0
        %2127 = vmatprep.subr.bf16.mxu0 %v1420
        %2128 = vmatpush1.bf16.msra.mxu0 %v1419
        %2129 = vmatprep.subr.bf16.mxu0 %v1412
        %2130 = vmatpush1.bf16.msra.mxu0 %v1411
        %2131 = vmatprep.subr.bf16.mxu0 %v1404
        %2132 = vmatpush1.bf16.msra.mxu0 %v1403
        %2133 = vmatprep.subr.bf16.mxu0 %v1396
        %2134 = vmatpush1.bf16.msra.mxu0 %v1395
        %2135 = vmatprep.subr.bf16.mxu0 %v1388
        %2136 = vmatpush1.bf16.msra.mxu0 %v1387
        %2137 = vmatprep.subr.bf16.mxu0 %v1380
        %2138 = vmatpush1.bf16.msra.mxu0 %v1379
        %2139 = vmatprep.subr.bf16.mxu0 %v1372
        %2140 = vmatpush1.bf16.msra.mxu0 %v1371
        %2141 = vmatprep.subr.bf16.mxu0 %v1364
        %2142 = vmatpush1.bf16.msra.mxu0 %v1363
        %2143 = vmatprep.subr.bf16.mxu0 %v1484
        %2144 = vmatpush2.bf16.msra.mxu0 %v1483
        %2145 = vmatprep.subr.bf16.mxu0 %v1476
        %2146 = vmatpush2.bf16.msra.mxu0 %v1475
        %2147 = vmatprep.subr.bf16.mxu0 %v1468
        %2148 = vmatpush2.bf16.msra.mxu0 %v1467
        %2149 = vmatprep.subr.bf16.mxu0 %v1460
        %2150 = vmatpush2.bf16.msra.mxu0 %v1459
        %2151 = vmatprep.subr.bf16.mxu0 %v1452
        %2152 = vmatpush2.bf16.msra.mxu0 %v1451
        %2153 = vmatprep.subr.bf16.mxu0 %v1444
        %2154 = vmatpush2.bf16.msra.mxu0 %v1443
        %2155 = vmatprep.subr.bf16.mxu0 %v1436
        %2156 = vmatpush2.bf16.msra.mxu0 %v1435
        %2157 = vmatprep.subr.bf16.mxu0 %v1428
        %2158 = vmatpush2.bf16.msra.mxu0 %v1427
        %2159 = vmatprep.mubr.bf16.mxu0 %v582
        %2160 = vmatmul.mubr.bf16.gmra.mxu0 %v581
        %v2161 = vpop.f32.mrf.mxu0
        %v2162 = vadd.f32 %v556, %v2161
        %v2163 = vpop.f32.mrf.mxu0
        %v2164 = vadd.f32 %v560, %v2163
        %v2165 = vpop.f32.mrf.mxu0
        %v2166 = vadd.f32 %v556, %v2165
        %v2167 = vpop.f32.mrf.mxu0
        %v2168 = vadd.f32 %v560, %v2167
        %2169 = vdwg.mxu0
        %2170 = vmatprep.subr.bf16.mxu0 %v1548
        %2171 = vmatpush1.bf16.msra.mxu0 %v1547
        %2172 = vmatprep.subr.bf16.mxu0 %v1540
        %2173 = vmatpush1.bf16.msra.mxu0 %v1539
        %2174 = vmatprep.subr.bf16.mxu0 %v1532
        %2175 = vmatpush1.bf16.msra.mxu0 %v1531
        %2176 = vmatprep.subr.bf16.mxu0 %v1524
        %2177 = vmatpush1.bf16.msra.mxu0 %v1523
        %2178 = vmatprep.subr.bf16.mxu0 %v1516
        %2179 = vmatpush1.bf16.msra.mxu0 %v1515
        %2180 = vmatprep.subr.bf16.mxu0 %v1508
        %2181 = vmatpush1.bf16.msra.mxu0 %v1507
        %2182 = vmatprep.subr.bf16.mxu0 %v1500
        %2183 = vmatpush1.bf16.msra.mxu0 %v1499
        %2184 = vmatprep.subr.bf16.mxu0 %v1492
        %2185 = vmatpush1.bf16.msra.mxu0 %v1491
        %2186 = vmatprep.subr.bf16.mxu0 %v1612
        %2187 = vmatpush2.bf16.msra.mxu0 %v1611
        %2188 = vmatprep.subr.bf16.mxu0 %v1604
        %2189 = vmatpush2.bf16.msra.mxu0 %v1603
        %2190 = vmatprep.subr.bf16.mxu0 %v1596
        %2191 = vmatpush2.bf16.msra.mxu0 %v1595
        %2192 = vmatprep.subr.bf16.mxu0 %v1588
        %2193 = vmatpush2.bf16.msra.mxu0 %v1587
        %2194 = vmatprep.subr.bf16.mxu0 %v1580
        %2195 = vmatpush2.bf16.msra.mxu0 %v1579
        %2196 = vmatprep.subr.bf16.mxu0 %v1572
        %2197 = vmatpush2.bf16.msra.mxu0 %v1571
        %2198 = vmatprep.subr.bf16.mxu0 %v1564
        %2199 = vmatpush2.bf16.msra.mxu0 %v1563
        %2200 = vmatprep.subr.bf16.mxu0 %v1556
        %2201 = vmatpush2.bf16.msra.mxu0 %v1555
        %2202 = vmatprep.mubr.bf16.mxu0 %v584
        %2203 = vmatmul.mubr.bf16.gmra.mxu0 %v583
        %v2204 = vpop.f32.mrf.mxu0
        %v2205 = vadd.f32 %v2162, %v2204
        %v2206 = vpop.f32.mrf.mxu0
        %v2207 = vadd.f32 %v2164, %v2206
        %v2208 = vpop.f32.mrf.mxu0
        %v2209 = vadd.f32 %v2166, %v2208
        %v2210 = vpop.f32.mrf.mxu0
        %v2211 = vadd.f32 %v2168, %v2210
        %2212 = vdwg.mxu0
        %2213 = vst [vmem:[%s261] sm:$0xff] %v1947
        %2214 = vst [vmem:[%s261 + $0x8] sm:$0xff] %v1949
        %2215 = vst [vmem:[%s261 + $0x10] sm:$0xff] %v2033
        %2216 = vst [vmem:[%s261 + $0x18] sm:$0xff] %v2035
        %2217 = vst [vmem:[%s261 + $0x20] sm:$0xff] %v2119
        %2218 = vst [vmem:[%s261 + $0x28] sm:$0xff] %v2121
        %2219 = vst [vmem:[%s261 + $0x30] sm:$0xff] %v2205
        %2220 = vst [vmem:[%s261 + $0x38] sm:$0xff] %v2207
        %2221 = vst [vmem:[%s261 + $0x40] sm:$0xff] %v1951
        %2222 = vst [vmem:[%s261 + $0x48] sm:$0xff] %v1953
        %2223 = vst [vmem:[%s261 + $0x50] sm:$0xff] %v2037
        %2224 = vst [vmem:[%s261 + $0x58] sm:$0xff] %v2039
        %2225 = vst [vmem:[%s261 + $0x60] sm:$0xff] %v2123
        %2226 = vst [vmem:[%s261 + $0x68] sm:$0xff] %v2125
        %2227 = vst [vmem:[%s261 + $0x70] sm:$0xff] %v2209
        %2228 = vst [vmem:[%s261 + $0x78] sm:$0xff] %v2211
        %s2229 = sand.u32 %s121, 1
        %s2230 = scalar_lea.sflag [#allocation4], %s2229
        %s2231 = sand.u32 %s121, 1
        %s2232 = smul.addr %s2231, 128
        %s2233 = scalar_lea.vmem [#allocation8], %s2232
        // Predicated region
        $region45: #{tpu_custom_call.1} parent=31 // pred_check
          %p2234 = pneg %p131
        $region46: #{tpu_custom_call.1} parent=31 // pred_check_branch
          %2236 = sbr.rel (%p2234) target = $region48
        $region47: #{tpu_custom_call.1} parent=31 // pred_region
          %s2237 = smul.u32 2, %s25
          %s2238 = smul.u32 8, %s26
          %s2240 = ssub.s32 2048, 2048
          %2241 = vsyncadd %s2230, %s2240
          %s2242 = smul.addr %s2237, 16
          %s2243 = sadd.s32 %s2238, %s2242
          %s2244 = smul.addr %s2243, 128
          %s2245 = scalar_lea.hbm %s3, %s2244
          %s2246 = sshll.u32 %s2233, 4
          %s2247 = int_to_ptr.vmem [resolvable:$true] %s2246
          %2252 = dma.vmem_to_hbm [thread:$0]  %s2247, 2048, %s2245, %s2230, 1024, 2048, 64
        $region48: #{tpu_custom_call.1} parent=31 // pred_fallthru
          _
      $region32: #{tpu_custom_call.1} parent=5 // pred_fallthru
        _
      %p2253 = scmp.le.s32.totalorder 2, %s16
      // Predicated region
      $region49: #{tpu_custom_call.1} parent=5 // pred_check
        %p2254 = pneg %p2253
      $region50: #{tpu_custom_call.1} parent=5 // pred_check_branch
        %2256 = sbr.rel (%p2254) target = $region52
      $region51: #{tpu_custom_call.1} parent=5 // pred_region
        %s2257 = ssub.s32 %s16, 2
        // Predicated region
        $region53: #{tpu_custom_call.1} parent=51 // pred_check
          %p2258 = pneg %p137
        $region54: #{tpu_custom_call.1} parent=51 // pred_check_branch
          %2260 = sbr.rel (%p2258) target = $region56
        $region55: #{tpu_custom_call.1} parent=51 // pred_region
          %s2261 = sand.u32 %s122, 1
          %s2262 = scalar_lea.sflag [#allocation4], %s2261
          %s2263 = sand.u32 %s122, 1
          %s2264 = smul.addr %s2263, 128
          %s2265 = scalar_lea.vmem [#allocation8], %s2264
          %2266 = dma.done %s2262, 2048
        $region56: #{tpu_custom_call.1} parent=51 // pred_fallthru
          _
      $region52: #{tpu_custom_call.1} parent=5 // pred_fallthru
        _
    $region6: #{tpu_custom_call.1} parent=1 // loop_footer
      %s20 = sadd.s32 1, %s16
    $region7: #{tpu_custom_call.1} parent=1 // loop_footer_branch
      %15 = sbr.rel target = $region3
    $region8: #{tpu_custom_call.1} parent=1 // loop_exit
      _
    %2267 = vsyncpa [#allocation3], 1
    %s2268 = scalar_lea.sflag [#allocation3], 1
    %2269 = vsyncpa %s2268, 1
    %2270 = vsyncpa [#allocation6], 1
    %s2271 = scalar_lea.sflag [#allocation6], 1
    %2272 = vsyncpa %s2271, 1
    %2273 = vsyncpa [#allocation4], 1
    %s2274 = scalar_lea.sflag [#allocation4], 1
    %2275 = vsyncpa %s2274, 1

</llo_original>
